<compile_context>
chip_gen: v7x
topology: tpu7x:2x2x1
jax: 0.10.0
libtpu: 0.0.40
codegen_flags: <defaults>
</compile_context>

<pallas_src>
import jax
import jax.numpy as jnp
from jax import lax
from jax.experimental import pallas as pl
from jax.experimental.pallas import tpu as pltpu

ALPHA = -0.5
BETA = -0.5
POLY_DEGREE = 2
BN_EPS = 1e-5

# lhs-transposed matmul: out[n, h] = sum_c lhs[c, n] * rhs[c, h]
_TN_DIMS = (((0,), (0,)), ((), ()))


def _jacobi_recur_coeffs(degree, a, b):
    """Host-side (Python float) recurrence coefficients for i = 2..degree."""
    out = []
    for i in range(2, degree + 1):
        A = (2 * i + a + b - 1) * (2 * i + a + b) / (2 * i * (i + a + b))
        B = (2 * i + a + b - 1) * (a ** 2 - b ** 2) / (
            2 * i * (i + a + b) * (2 * i + a + b - 2))
        C = -2 * (i + a - 1) * (i + b - 1) * (2 * i + a + b) / (
            2 * i * (i + a + b) * (2 * i + a + b - 2))
        out.append((A, B, C))
    return out


def _jacobi_basis(x, degree, a, b):
    """List of degree+1 arrays (Jacobi polynomials of x), same shape as x."""
    basis = [jnp.ones_like(x)]
    if degree > 0:
        basis.append((a - b + (a + b + 2.0) * x) / 2.0)
    for (A, B, C) in _jacobi_recur_coeffs(degree, a, b):
        basis.append((A * x + B) * basis[-1] + C * basis[-2])
    return basis


def _kan_rows(t_rows, w):
    """sum_d P_d(t) @ W_d for degrees 1..D (degree-0 is folded into the shift).

    t_rows: (rows, C) f32 activations (already tanh'ed)
    w:      (D, C, H) bf16 per-degree weights (eval-BN scale folded in)
    """
    basis = _jacobi_basis(t_rows, POLY_DEGREE, ALPHA, BETA)[1:]
    acc = jnp.zeros((t_rows.shape[0], w.shape[-1]), jnp.float32)
    for d, bd in enumerate(basis):
        acc = acc + jnp.dot(bd.astype(w.dtype), w[d],
                            preferred_element_type=jnp.float32)
    return acc


def pointnet_kan_kernel(x_ref, w1_ref, s1_ref, w2_ref, s2_ref, w3_ref, s3_ref,
                        hw1_ref, hb1_ref, hw2_ref, hb2_ref, hw3_ref, hb3_ref,
                        out_ref):
    # x_ref : (B, C_in, N)      native NCL layout (no host transpose)
    # w*_ref: (D, C_l, H_l)     per-degree KAN weights, eval-BN scale folded in
    #                           (w1 kept f32: K = C_in is tiny, bf16 buys nothing)
    # s*_ref: (1, H_l)          eval-BN shift + folded degree-0 column sums
    # hw*/hb*: fc head weights (in, out) bf16 / bias rows f32 (eval-BN folded,
    #          fc3 zero-padded to a 128-lane multiple)
    # out_ref: (B, C_pad)       lane-dense padded logits
    B, _, N = x_ref.shape
    f32 = jnp.float32

    # ---- KAN layer 1: consume x in (C_in, N) layout; the transposed-lhs dot
    #      (contract dim 0 of both operands) lands the result points-major, so
    #      no NCL->NLC transpose of x is ever materialized.
    w1 = w1_ref[...]                                           # (D, C_in, H1) f32
    rows = []
    for b in range(B):                                         # static unroll (see TODO)
        t = jnp.tanh(x_ref[b].astype(f32))                     # (C_in, N)
        basis = _jacobi_basis(t, POLY_DEGREE, ALPHA, BETA)[1:]
        acc = jnp.zeros((N, w1.shape[-1]), f32)
        for d, bd in enumerate(basis):
            acc = acc + lax.dot_general(bd, w1[d], _TN_DIMS,
                                        preferred_element_type=f32)  # (N, H1)
        rows.append(acc)
    h = jnp.concatenate(rows, axis=0) + s1_ref[...]            # (B*N, H1)

    # ---- KAN layer 2 (per-degree bf16 dots, f32 accumulation) ----
    h = _kan_rows(jnp.tanh(h), w2_ref[...]) + s2_ref[...]      # (B*N, H2)

    # ---- KAN layer 3 (additive BN shift commutes with max -> applied after) --
    h = _kan_rows(jnp.tanh(h), w3_ref[...])                    # (B*N, H3)

    # ---- global max pool over points ----
    H3 = h.shape[-1]
    g = jnp.max(h.reshape(B, N, H3), axis=1) + s3_ref[...]     # (B, H3)

    # ---- classification head: fc+BN(eval)+ReLU x2, fc3 (dropout = identity) --
    a = jnp.maximum(jnp.dot(g.astype(hw1_ref.dtype), hw1_ref[...],
                            preferred_element_type=f32) + hb1_ref[...], 0.0)
    a = jnp.maximum(jnp.dot(a.astype(hw2_ref.dtype), hw2_ref[...],
                            preferred_element_type=f32) + hb2_ref[...], 0.0)
    y = jnp.dot(a.astype(hw3_ref.dtype), hw3_ref[...],
                preferred_element_type=f32) + hb3_ref[...]     # (B, C_pad)

    out_ref[...] = y.astype(out_ref.dtype)                     # lane-dense store


def pointnet_kan_forward(x, kan_coeffs, kan_bn, fc_weights, fc_biases, fc_bn):
    """Fused group_all SA stage + classification head (eval mode).

    x:          (B, C_in, N) float32, PyTorch NCL layout.
    kan_coeffs: list of 3 arrays (C_l, H_l, D+1)  (KANshared.jacobi_coeffs)
    kan_bn:     list of 3 tuples (gamma, beta, running_mean, running_var)
    fc_weights: list of 3 arrays (in, out):  (H3,F1), (F1,F2), (F2,C_out)
    fc_biases:  list of 3 arrays (out,)
    fc_bn:      list of 2 tuples for bn1, bn2
    Returns (B, C_out) float32 logits.
    """
    B, C_in, N = x.shape
    D = POLY_DEGREE
    assert N % 8 == 0, "pad the point axis to a multiple of 8 (sublane group)"

    # --- fold eval-BN scale into each KANshared layer's weights and the
    #     constant degree-0 Jacobi term (P_0 == 1) into its additive shift ---
    kan_w, kan_shift = [], []
    for coeffs, (gm, bt, rm, rv) in zip(kan_coeffs, kan_bn):
        scale = gm / jnp.sqrt(rv + BN_EPS)                       # (H,)
        shift = bt - rm * scale                                  # (H,)
        wfull = jnp.transpose(coeffs, (2, 0, 1)) * scale[None, None, :]  # (D+1,C,H)
        shift = shift + jnp.sum(wfull[0], axis=0)                # exact degree-0 fold
        kan_w.append(wfull[1:])                                  # (D, C, H)
        kan_shift.append(shift.reshape(1, -1).astype(jnp.float32))
    w1 = kan_w[0].astype(jnp.float32)      # K = C_in is tiny -> keep f32 (free)
    w2 = kan_w[1].astype(jnp.bfloat16)
    w3 = kan_w[2].astype(jnp.bfloat16)
    s1, s2, s3 = kan_shift

    # --- fold eval-BN + bias into the fc head; pad fc3 out-dim to 128 lanes ---
    (g1, b1, m1, v1), (g2, b2, m2, v2) = fc_bn
    sc1 = g1 / jnp.sqrt(v1 + BN_EPS)
    sc2 = g2 / jnp.sqrt(v2 + BN_EPS)
    hw1 = (fc_weights[0] * sc1[None, :]).astype(jnp.bfloat16)
    hb1 = (fc_biases[0] * sc1 + b1 - m1 * sc1).reshape(1, -1).astype(jnp.float32)
    hw2 = (fc_weights[1] * sc2[None, :]).astype(jnp.bfloat16)
    hb2 = (fc_biases[1] * sc2 + b2 - m2 * sc2).reshape(1, -1).astype(jnp.float32)
    F2, C_out = fc_weights[2].shape
    C_pad = ((C_out + 127) // 128) * 128
    hw3 = jnp.zeros((F2, C_pad), jnp.float32).at[:, :C_out].set(fc_weights[2])
    hw3 = hw3.astype(jnp.bfloat16)
    hb3 = jnp.zeros((1, C_pad), jnp.float32).at[:, :C_out].set(
        fc_biases[2].reshape(1, -1))

    inputs = (x, w1, s1, w2, s2, w3, s3, hw1, hb1, hw2, hb2, hw3, hb3)
    in_specs = [pl.BlockSpec(a.shape, lambda i, nd=a.ndim: (0,) * nd)
                for a in inputs]

    H1 = kan_coeffs[0].shape[1]
    H2 = kan_coeffs[1].shape[1]
    H3 = kan_coeffs[2].shape[1]
    F1 = fc_weights[0].shape[1]
    flops = int(2 * B * N * D * (C_in * H1 + H1 * H2 + H2 * H3)
                + 2 * B * (H3 * F1 + F1 * F2 + F2 * C_pad))
    transcendentals = int(B * N * (C_in + H1 + H2))
    bytes_accessed = int(sum(int(a.size) * a.dtype.itemsize for a in inputs)
                         + B * C_pad * 4)

    out = pl.pallas_call(
        pointnet_kan_kernel,
        out_shape=jax.ShapeDtypeStruct((B, C_pad), jnp.float32),
        grid=(1,),
        in_specs=in_specs,
        out_specs=pl.BlockSpec((B, C_pad), lambda i: (0, 0)),
        compiler_params=pltpu.CompilerParams(
            dimension_semantics=("arbitrary",),
            vmem_limit_bytes=32 * 1024 * 1024),
        cost_estimate=pl.CostEstimate(flops=flops,
                                      transcendentals=transcendentals,
                                      bytes_accessed=bytes_accessed),
    )(*inputs)

    return out[:, :C_out]


# ------------------------- pure-JAX (f32) reference -------------------------

def _kan_shared_ref(x, coeffs):
    """Faithful replica of KANshared.forward; x: (B, C, N) -> (B, H, N)."""
    xt = jnp.tanh(jnp.transpose(x, (0, 2, 1)))                        # (B, N, C)
    jac = jnp.stack(_jacobi_basis(xt, POLY_DEGREE, ALPHA, BETA), axis=-1)
    jac = jnp.transpose(jac, (0, 2, 3, 1))                            # (B, C, D+1, N)
    return jnp.einsum('bids,iod->bos', jac, coeffs)                   # (B, H, N)


def reference_forward(x, kan_coeffs, kan_bn, fc_weights, fc_biases, fc_bn):
    """group_all SA (KANshared+BN chain, max-pool) + fc head, eval mode, f32.

    Note: in the group_all path the PyTorch module reshapes to (B*N, C, 1)
    before KANshared/BatchNorm1d; with eval-mode running stats this is exactly
    the per-channel affine applied below on the (B, C, N) tensor.
    """
    h = x
    for coeffs, (gm, bt, rm, rv) in zip(kan_coeffs, kan_bn):
        h = _kan_shared_ref(h, coeffs)
        scale = gm / jnp.sqrt(rv + BN_EPS)
        shift = bt - rm * scale
        h = h * scale[None, :, None] + shift[None, :, None]
    g = jnp.max(h, axis=-1)                                           # (B, H3)

    (g1, b1, m1, v1), (g2, b2, m2, v2) = fc_bn
    a = g @ fc_weights[0] + fc_biases[0]
    a = jnp.maximum((a - m1) / jnp.sqrt(v1 + BN_EPS) * g1 + b1, 0.0)
    a = a @ fc_weights[1] + fc_biases[1]
    a = jnp.maximum((a - m2) / jnp.sqrt(v2 + BN_EPS) * g2 + b2, 0.0)
    return a @ fc_weights[2] + fc_biases[2]                           # (B, C_out)


if __name__ == "__main__":
    # Small shapes consistent with the module (scaled-down sa3 + head):
    # B=2 point clouds, C_in=4 channels (xyz + 1 feature), N=16 points,
    # mlp=[32, 32, 64], fc head 64 -> 32 -> 16 -> 8 classes, degree=2.
    B, C_in, N = 2, 4, 16
    mlp = (32, 32, 64)
    F1, F2, C_out = 32, 16, 8
    D = POLY_DEGREE

    keys = iter(jax.random.split(jax.random.PRNGKey(0), 40))
    nk = lambda: next(keys)

    def make_bn(h):
        return (1.0 + 0.1 * jax.random.normal(nk(), (h,), jnp.float32),
                0.1 * jax.random.normal(nk(), (h,), jnp.float32),
                0.1 * jax.random.normal(nk(), (h,), jnp.float32),
                jax.random.uniform(nk(), (h,), jnp.float32, 0.5, 1.5))

    x = jax.random.normal(nk(), (B, C_in, N), jnp.float32)

    kan_coeffs, kan_bn = [], []
    c_prev = C_in
    for h in mlp:
        # nn.init.normal_(coeffs, std = 1/(input_dim*(degree+1)))
        kan_coeffs.append(jax.random.normal(nk(), (c_prev, h, D + 1), jnp.float32)
                          * (1.0 / (c_prev * (D + 1))))
        kan_bn.append(make_bn(h))
        c_prev = h

    fc_dims = [(mlp[-1], F1), (F1, F2), (F2, C_out)]
    fc_weights = [jax.random.normal(nk(), (i, o), jnp.float32) / jnp.sqrt(float(i))
                  for (i, o) in fc_dims]
    fc_biases = [0.1 * jax.random.normal(nk(), (o,), jnp.float32)
                 for (_, o) in fc_dims]
    fc_bn = [make_bn(F1), make_bn(F2)]

    out = pointnet_kan_forward(x, kan_coeffs, kan_bn, fc_weights, fc_biases, fc_bn)
    out = jax.block_until_ready(out)

    ref = reference_forward(x, kan_coeffs, kan_bn, fc_weights, fc_biases, fc_bn)
    assert out.shape == (B, C_out), out.shape
    max_diff = float(jnp.max(jnp.abs(out - ref)))
    # bf16 MXU operands (f32 accumulation) -> relaxed tolerance vs f32 reference
    assert bool(jnp.allclose(out, ref, atol=2e-2, rtol=2e-2)), \
        f"max abs diff {max_diff}"

    print("KERNEL_OK")
</pallas_src>

<mosaic_0001>
module attributes {stable_mosaic.version = 11 : i64} {
  func.func @pointnet_kan_kernel(%arg0: i32, %arg1: memref<2x4x16xf32, #tpu.memory_space<vmem>>, %arg2: memref<2x4x32xf32, #tpu.memory_space<vmem>>, %arg3: memref<1x32xf32, #tpu.memory_space<vmem>>, %arg4: memref<2x32x32xbf16, #tpu.memory_space<vmem>>, %arg5: memref<1x32xf32, #tpu.memory_space<vmem>>, %arg6: memref<2x32x64xbf16, #tpu.memory_space<vmem>>, %arg7: memref<1x64xf32, #tpu.memory_space<vmem>>, %arg8: memref<64x32xbf16, #tpu.memory_space<vmem>>, %arg9: memref<1x32xf32, #tpu.memory_space<vmem>>, %arg10: memref<32x16xbf16, #tpu.memory_space<vmem>>, %arg11: memref<1x16xf32, #tpu.memory_space<vmem>>, %arg12: memref<16x128xbf16, #tpu.memory_space<vmem>>, %arg13: memref<1x128xf32, #tpu.memory_space<vmem>>, %arg14: memref<2x128xf32, #tpu.memory_space<vmem>>) attributes {dimension_semantics = [#tpu.dimension_semantics<arbitrary>], iteration_bounds = array<i64: 1>, scalar_prefetch = 0 : i64, scratch_operands = 0 : i64, tpu.core_type = #tpu.core_type<tc>, window_params = [{pipeline_mode = #tpu.pipeline_mode<synchronous>, transform_indices = @transform_0, window_bounds = array<i64: 2, 4, 16>}, {pipeline_mode = #tpu.pipeline_mode<synchronous>, transform_indices = @transform_1, window_bounds = array<i64: 2, 4, 32>}, {pipeline_mode = #tpu.pipeline_mode<synchronous>, transform_indices = @transform_2, window_bounds = array<i64: 1, 32>}, {pipeline_mode = #tpu.pipeline_mode<synchronous>, transform_indices = @transform_3, window_bounds = array<i64: 2, 32, 32>}, {pipeline_mode = #tpu.pipeline_mode<synchronous>, transform_indices = @transform_4, window_bounds = array<i64: 1, 32>}, {pipeline_mode = #tpu.pipeline_mode<synchronous>, transform_indices = @transform_5, window_bounds = array<i64: 2, 32, 64>}, {pipeline_mode = #tpu.pipeline_mode<synchronous>, transform_indices = @transform_6, window_bounds = array<i64: 1, 64>}, {pipeline_mode = #tpu.pipeline_mode<synchronous>, transform_indices = @transform_7, window_bounds = array<i64: 64, 32>}, {pipeline_mode = #tpu.pipeline_mode<synchronous>, transform_indices = @transform_8, window_bounds = array<i64: 1, 32>}, {pipeline_mode = #tpu.pipeline_mode<synchronous>, transform_indices = @transform_9, window_bounds = array<i64: 32, 16>}, {pipeline_mode = #tpu.pipeline_mode<synchronous>, transform_indices = @transform_10, window_bounds = array<i64: 1, 16>}, {pipeline_mode = #tpu.pipeline_mode<synchronous>, transform_indices = @transform_11, window_bounds = array<i64: 16, 128>}, {pipeline_mode = #tpu.pipeline_mode<synchronous>, transform_indices = @transform_12, window_bounds = array<i64: 1, 128>}, {pipeline_mode = #tpu.pipeline_mode<synchronous>, transform_indices = @transform_13, window_bounds = array<i64: 2, 128>}]} {
    %c0 = arith.constant 0 : index
    %c0_0 = arith.constant 0 : index
    %c0_1 = arith.constant 0 : index
    %0 = vector.load %arg2[%c0, %c0_0, %c0_1] : memref<2x4x32xf32, #tpu.memory_space<vmem>>, vector<2x4x32xf32>
    %c0_2 = arith.constant 0 : index
    %c0_3 = arith.constant 0 : index
    %c0_4 = arith.constant 0 : index
    %1 = vector.load %arg1[%c0_2, %c0_3, %c0_4] : memref<2x4x16xf32, #tpu.memory_space<vmem>>, vector<1x4x16xf32>
    %2 = vector.shape_cast %1 : vector<1x4x16xf32> to vector<4x16xf32>
    %3 = math.tanh %2 : vector<4x16xf32>
    %cst = arith.constant 1.000000e+00 : f32
    %4 = vector.broadcast %cst : f32 to vector<4x16xf32>
    %cst_5 = arith.constant 1.000000e+00 : f32
    %5 = vector.broadcast %cst_5 : f32 to vector<4x16xf32>
    %6 = arith.mulf %5, %3 : vector<4x16xf32>
    %cst_6 = arith.constant 0.000000e+00 : f32
    %7 = vector.broadcast %cst_6 : f32 to vector<4x16xf32>
    %8 = arith.addf %7, %6 : vector<4x16xf32>
    %cst_7 = arith.constant 2.000000e+00 : f32
    %9 = vector.broadcast %cst_7 : f32 to vector<4x16xf32>
    %10 = arith.divf %8, %9 : vector<4x16xf32>
    %cst_8 = arith.constant 1.500000e+00 : f32
    %11 = vector.broadcast %cst_8 : f32 to vector<4x16xf32>
    %12 = arith.mulf %11, %3 : vector<4x16xf32>
    %cst_9 = arith.constant 0.000000e+00 : f32
    %13 = vector.broadcast %cst_9 : f32 to vector<4x16xf32>
    %14 = arith.addf %12, %13 : vector<4x16xf32>
    %15 = arith.mulf %14, %10 : vector<4x16xf32>
    %cst_10 = arith.constant -3.750000e-01 : f32
    %16 = vector.broadcast %cst_10 : f32 to vector<4x16xf32>
    %17 = arith.mulf %16, %4 : vector<4x16xf32>
    %18 = arith.addf %15, %17 : vector<4x16xf32>
    %cst_11 = arith.constant 0.000000e+00 : f32
    %19 = vector.broadcast %cst_11 : f32 to vector<16x32xf32>
    %20 = vector.extract_strided_slice %0 {offsets = [0, 0, 0], sizes = [1, 4, 32], strides = [1, 1, 1]} : vector<2x4x32xf32> to vector<1x4x32xf32>
    %21 = vector.shape_cast %20 : vector<1x4x32xf32> to vector<4x32xf32>
    %cst_12 = arith.constant dense<0.000000e+00> : vector<16x32xf32>
    %22 = tpu.matmul %10, %21, %cst_12 {dimension_numbers = #tpu.dot_dimension_numbers<[0], [0], [1], [1], [0, 1, 1, 1], [], []>} : vector<4x16xf32>, vector<4x32xf32>, vector<16x32xf32> -> vector<16x32xf32>
    %23 = arith.addf %19, %22 : vector<16x32xf32>
    %24 = vector.extract_strided_slice %0 {offsets = [1, 0, 0], sizes = [1, 4, 32], strides = [1, 1, 1]} : vector<2x4x32xf32> to vector<1x4x32xf32>
    %25 = vector.shape_cast %24 : vector<1x4x32xf32> to vector<4x32xf32>
    %cst_13 = arith.constant dense<0.000000e+00> : vector<16x32xf32>
    %26 = tpu.matmul %18, %25, %cst_13 {dimension_numbers = #tpu.dot_dimension_numbers<[0], [0], [1], [1], [0, 1, 1, 1], [], []>} : vector<4x16xf32>, vector<4x32xf32>, vector<16x32xf32> -> vector<16x32xf32>
    %27 = arith.addf %23, %26 : vector<16x32xf32>
    %c1 = arith.constant 1 : index
    %c0_14 = arith.constant 0 : index
    %c0_15 = arith.constant 0 : index
    %28 = vector.load %arg1[%c1, %c0_14, %c0_15] : memref<2x4x16xf32, #tpu.memory_space<vmem>>, vector<1x4x16xf32>
    %29 = vector.shape_cast %28 : vector<1x4x16xf32> to vector<4x16xf32>
    %30 = math.tanh %29 : vector<4x16xf32>
    %cst_16 = arith.constant 1.000000e+00 : f32
    %31 = vector.broadcast %cst_16 : f32 to vector<4x16xf32>
    %cst_17 = arith.constant 1.000000e+00 : f32
    %32 = vector.broadcast %cst_17 : f32 to vector<4x16xf32>
    %33 = arith.mulf %32, %30 : vector<4x16xf32>
    %cst_18 = arith.constant 0.000000e+00 : f32
    %34 = vector.broadcast %cst_18 : f32 to vector<4x16xf32>
    %35 = arith.addf %34, %33 : vector<4x16xf32>
    %cst_19 = arith.constant 2.000000e+00 : f32
    %36 = vector.broadcast %cst_19 : f32 to vector<4x16xf32>
    %37 = arith.divf %35, %36 : vector<4x16xf32>
    %cst_20 = arith.constant 1.500000e+00 : f32
    %38 = vector.broadcast %cst_20 : f32 to vector<4x16xf32>
    %39 = arith.mulf %38, %30 : vector<4x16xf32>
    %cst_21 = arith.constant 0.000000e+00 : f32
    %40 = vector.broadcast %cst_21 : f32 to vector<4x16xf32>
    %41 = arith.addf %39, %40 : vector<4x16xf32>
    %42 = arith.mulf %41, %37 : vector<4x16xf32>
    %cst_22 = arith.constant -3.750000e-01 : f32
    %43 = vector.broadcast %cst_22 : f32 to vector<4x16xf32>
    %44 = arith.mulf %43, %31 : vector<4x16xf32>
    %45 = arith.addf %42, %44 : vector<4x16xf32>
    %cst_23 = arith.constant 0.000000e+00 : f32
    %46 = vector.broadcast %cst_23 : f32 to vector<16x32xf32>
    %47 = vector.extract_strided_slice %0 {offsets = [0, 0, 0], sizes = [1, 4, 32], strides = [1, 1, 1]} : vector<2x4x32xf32> to vector<1x4x32xf32>
    %48 = vector.shape_cast %47 : vector<1x4x32xf32> to vector<4x32xf32>
    %cst_24 = arith.constant dense<0.000000e+00> : vector<16x32xf32>
    %49 = tpu.matmul %37, %48, %cst_24 {dimension_numbers = #tpu.dot_dimension_numbers<[0], [0], [1], [1], [0, 1, 1, 1], [], []>} : vector<4x16xf32>, vector<4x32xf32>, vector<16x32xf32> -> vector<16x32xf32>
    %50 = arith.addf %46, %49 : vector<16x32xf32>
    %51 = vector.extract_strided_slice %0 {offsets = [1, 0, 0], sizes = [1, 4, 32], strides = [1, 1, 1]} : vector<2x4x32xf32> to vector<1x4x32xf32>
    %52 = vector.shape_cast %51 : vector<1x4x32xf32> to vector<4x32xf32>
    %cst_25 = arith.constant dense<0.000000e+00> : vector<16x32xf32>
    %53 = tpu.matmul %45, %52, %cst_25 {dimension_numbers = #tpu.dot_dimension_numbers<[0], [0], [1], [1], [0, 1, 1, 1], [], []>} : vector<4x16xf32>, vector<4x32xf32>, vector<16x32xf32> -> vector<16x32xf32>
    %54 = arith.addf %50, %53 : vector<16x32xf32>
    %55 = tpu.concatenate %27, %54 in 0 : vector<16x32xf32>, vector<16x32xf32> -> vector<32x32xf32>
    %c0_26 = arith.constant 0 : index
    %c0_27 = arith.constant 0 : index
    %56 = vector.load %arg3[%c0_26, %c0_27] : memref<1x32xf32, #tpu.memory_space<vmem>>, vector<1x32xf32>
    %57 = vector.broadcast %56 : vector<1x32xf32> to vector<32x32xf32>
    %58 = arith.addf %55, %57 : vector<32x32xf32>
    %59 = math.tanh %58 : vector<32x32xf32>
    %c0_28 = arith.constant 0 : index
    %c0_29 = arith.constant 0 : index
    %c0_30 = arith.constant 0 : index
    %60 = vector.load %arg4[%c0_28, %c0_29, %c0_30] : memref<2x32x32xbf16, #tpu.memory_space<vmem>>, vector<2x32x32xbf16>
    %cst_31 = arith.constant 1.000000e+00 : f32
    %61 = vector.broadcast %cst_31 : f32 to vector<32x32xf32>
    %cst_32 = arith.constant 1.000000e+00 : f32
    %62 = vector.broadcast %cst_32 : f32 to vector<32x32xf32>
    %63 = arith.mulf %62, %59 : vector<32x32xf32>
    %cst_33 = arith.constant 0.000000e+00 : f32
    %64 = vector.broadcast %cst_33 : f32 to vector<32x32xf32>
    %65 = arith.addf %64, %63 : vector<32x32xf32>
    %cst_34 = arith.constant 2.000000e+00 : f32
    %66 = vector.broadcast %cst_34 : f32 to vector<32x32xf32>
    %67 = arith.divf %65, %66 : vector<32x32xf32>
    %cst_35 = arith.constant 1.500000e+00 : f32
    %68 = vector.broadcast %cst_35 : f32 to vector<32x32xf32>
    %69 = arith.mulf %68, %59 : vector<32x32xf32>
    %cst_36 = arith.constant 0.000000e+00 : f32
    %70 = vector.broadcast %cst_36 : f32 to vector<32x32xf32>
    %71 = arith.addf %69, %70 : vector<32x32xf32>
    %72 = arith.mulf %71, %67 : vector<32x32xf32>
    %cst_37 = arith.constant -3.750000e-01 : f32
    %73 = vector.broadcast %cst_37 : f32 to vector<32x32xf32>
    %74 = arith.mulf %73, %61 : vector<32x32xf32>
    %75 = arith.addf %72, %74 : vector<32x32xf32>
    %cst_38 = arith.constant 0.000000e+00 : f32
    %76 = vector.broadcast %cst_38 : f32 to vector<32x32xf32>
    %77 = arith.truncf %67 : vector<32x32xf32> to vector<32x32xbf16>
    %78 = vector.extract_strided_slice %60 {offsets = [0, 0, 0], sizes = [1, 32, 32], strides = [1, 1, 1]} : vector<2x32x32xbf16> to vector<1x32x32xbf16>
    %79 = vector.shape_cast %78 : vector<1x32x32xbf16> to vector<32x32xbf16>
    %cst_39 = arith.constant dense<0.000000e+00> : vector<32x32xf32>
    %80 = tpu.matmul %77, %79, %cst_39 {dimension_numbers = #tpu.dot_dimension_numbers<[1], [0], [0], [1], [0, 0, 1, 1], [], []>} : vector<32x32xbf16>, vector<32x32xbf16>, vector<32x32xf32> -> vector<32x32xf32>
    %81 = arith.addf %76, %80 : vector<32x32xf32>
    %82 = arith.truncf %75 : vector<32x32xf32> to vector<32x32xbf16>
    %83 = vector.extract_strided_slice %60 {offsets = [1, 0, 0], sizes = [1, 32, 32], strides = [1, 1, 1]} : vector<2x32x32xbf16> to vector<1x32x32xbf16>
    %84 = vector.shape_cast %83 : vector<1x32x32xbf16> to vector<32x32xbf16>
    %cst_40 = arith.constant dense<0.000000e+00> : vector<32x32xf32>
    %85 = tpu.matmul %82, %84, %cst_40 {dimension_numbers = #tpu.dot_dimension_numbers<[1], [0], [0], [1], [0, 0, 1, 1], [], []>} : vector<32x32xbf16>, vector<32x32xbf16>, vector<32x32xf32> -> vector<32x32xf32>
    %86 = arith.addf %81, %85 : vector<32x32xf32>
    %c0_41 = arith.constant 0 : index
    %c0_42 = arith.constant 0 : index
    %87 = vector.load %arg5[%c0_41, %c0_42] : memref<1x32xf32, #tpu.memory_space<vmem>>, vector<1x32xf32>
    %88 = vector.broadcast %87 : vector<1x32xf32> to vector<32x32xf32>
    %89 = arith.addf %86, %88 : vector<32x32xf32>
    %90 = math.tanh %89 : vector<32x32xf32>
    %c0_43 = arith.constant 0 : index
    %c0_44 = arith.constant 0 : index
    %c0_45 = arith.constant 0 : index
    %91 = vector.load %arg6[%c0_43, %c0_44, %c0_45] : memref<2x32x64xbf16, #tpu.memory_space<vmem>>, vector<2x32x64xbf16>
    %cst_46 = arith.constant 1.000000e+00 : f32
    %92 = vector.broadcast %cst_46 : f32 to vector<32x32xf32>
    %cst_47 = arith.constant 1.000000e+00 : f32
    %93 = vector.broadcast %cst_47 : f32 to vector<32x32xf32>
    %94 = arith.mulf %93, %90 : vector<32x32xf32>
    %cst_48 = arith.constant 0.000000e+00 : f32
    %95 = vector.broadcast %cst_48 : f32 to vector<32x32xf32>
    %96 = arith.addf %95, %94 : vector<32x32xf32>
    %cst_49 = arith.constant 2.000000e+00 : f32
    %97 = vector.broadcast %cst_49 : f32 to vector<32x32xf32>
    %98 = arith.divf %96, %97 : vector<32x32xf32>
    %cst_50 = arith.constant 1.500000e+00 : f32
    %99 = vector.broadcast %cst_50 : f32 to vector<32x32xf32>
    %100 = arith.mulf %99, %90 : vector<32x32xf32>
    %cst_51 = arith.constant 0.000000e+00 : f32
    %101 = vector.broadcast %cst_51 : f32 to vector<32x32xf32>
    %102 = arith.addf %100, %101 : vector<32x32xf32>
    %103 = arith.mulf %102, %98 : vector<32x32xf32>
    %cst_52 = arith.constant -3.750000e-01 : f32
    %104 = vector.broadcast %cst_52 : f32 to vector<32x32xf32>
    %105 = arith.mulf %104, %92 : vector<32x32xf32>
    %106 = arith.addf %103, %105 : vector<32x32xf32>
    %cst_53 = arith.constant 0.000000e+00 : f32
    %107 = vector.broadcast %cst_53 : f32 to vector<32x64xf32>
    %108 = arith.truncf %98 : vector<32x32xf32> to vector<32x32xbf16>
    %109 = vector.extract_strided_slice %91 {offsets = [0, 0, 0], sizes = [1, 32, 64], strides = [1, 1, 1]} : vector<2x32x64xbf16> to vector<1x32x64xbf16>
    %110 = vector.shape_cast %109 : vector<1x32x64xbf16> to vector<32x64xbf16>
    %cst_54 = arith.constant dense<0.000000e+00> : vector<32x64xf32>
    %111 = tpu.matmul %108, %110, %cst_54 {dimension_numbers = #tpu.dot_dimension_numbers<[1], [0], [0], [1], [0, 0, 1, 1], [], []>} : vector<32x32xbf16>, vector<32x64xbf16>, vector<32x64xf32> -> vector<32x64xf32>
    %112 = arith.addf %107, %111 : vector<32x64xf32>
    %113 = arith.truncf %106 : vector<32x32xf32> to vector<32x32xbf16>
    %114 = vector.extract_strided_slice %91 {offsets = [1, 0, 0], sizes = [1, 32, 64], strides = [1, 1, 1]} : vector<2x32x64xbf16> to vector<1x32x64xbf16>
    %115 = vector.shape_cast %114 : vector<1x32x64xbf16> to vector<32x64xbf16>
    %cst_55 = arith.constant dense<0.000000e+00> : vector<32x64xf32>
    %116 = tpu.matmul %113, %115, %cst_55 {dimension_numbers = #tpu.dot_dimension_numbers<[1], [0], [0], [1], [0, 0, 1, 1], [], []>} : vector<32x32xbf16>, vector<32x64xbf16>, vector<32x64xf32> -> vector<32x64xf32>
    %117 = arith.addf %112, %116 : vector<32x64xf32>
    %118 = vector.shape_cast %117 : vector<32x64xf32> to vector<2x16x64xf32>
    %cst_56 = arith.constant dense<0xFF800000> : vector<2x64xf32>
    %119 = vector.multi_reduction <maximumf>, %118, %cst_56 [1] : vector<2x16x64xf32> to vector<2x64xf32>
    %c0_57 = arith.constant 0 : index
    %c0_58 = arith.constant 0 : index
    %120 = vector.load %arg7[%c0_57, %c0_58] : memref<1x64xf32, #tpu.memory_space<vmem>>, vector<1x64xf32>
    %121 = vector.broadcast %120 : vector<1x64xf32> to vector<2x64xf32>
    %122 = arith.addf %119, %121 : vector<2x64xf32>
    %123 = arith.truncf %122 : vector<2x64xf32> to vector<2x64xbf16>
    %c0_59 = arith.constant 0 : index
    %c0_60 = arith.constant 0 : index
    %124 = vector.load %arg8[%c0_59, %c0_60] : memref<64x32xbf16, #tpu.memory_space<vmem>>, vector<64x32xbf16>
    %cst_61 = arith.constant dense<0.000000e+00> : vector<2x32xf32>
    %125 = tpu.matmul %123, %124, %cst_61 {dimension_numbers = #tpu.dot_dimension_numbers<[1], [0], [0], [1], [0, 0, 1, 1], [], []>} : vector<2x64xbf16>, vector<64x32xbf16>, vector<2x32xf32> -> vector<2x32xf32>
    %c0_62 = arith.constant 0 : index
    %c0_63 = arith.constant 0 : index
    %126 = vector.load %arg9[%c0_62, %c0_63] : memref<1x32xf32, #tpu.memory_space<vmem>>, vector<1x32xf32>
    %127 = vector.broadcast %126 : vector<1x32xf32> to vector<2x32xf32>
    %128 = arith.addf %125, %127 : vector<2x32xf32>
    %cst_64 = arith.constant 0.000000e+00 : f32
    %129 = vector.broadcast %cst_64 : f32 to vector<2x32xf32>
    %130 = arith.maximumf %128, %129 : vector<2x32xf32>
    %131 = arith.truncf %130 : vector<2x32xf32> to vector<2x32xbf16>
    %c0_65 = arith.constant 0 : index
    %c0_66 = arith.constant 0 : index
    %132 = vector.load %arg10[%c0_65, %c0_66] : memref<32x16xbf16, #tpu.memory_space<vmem>>, vector<32x16xbf16>
    %cst_67 = arith.constant dense<0.000000e+00> : vector<2x16xf32>
    %133 = tpu.matmul %131, %132, %cst_67 {dimension_numbers = #tpu.dot_dimension_numbers<[1], [0], [0], [1], [0, 0, 1, 1], [], []>} : vector<2x32xbf16>, vector<32x16xbf16>, vector<2x16xf32> -> vector<2x16xf32>
    %c0_68 = arith.constant 0 : index
    %c0_69 = arith.constant 0 : index
    %134 = vector.load %arg11[%c0_68, %c0_69] : memref<1x16xf32, #tpu.memory_space<vmem>>, vector<1x16xf32>
    %135 = vector.broadcast %134 : vector<1x16xf32> to vector<2x16xf32>
    %136 = arith.addf %133, %135 : vector<2x16xf32>
    %cst_70 = arith.constant 0.000000e+00 : f32
    %137 = vector.broadcast %cst_70 : f32 to vector<2x16xf32>
    %138 = arith.maximumf %136, %137 : vector<2x16xf32>
    %139 = arith.truncf %138 : vector<2x16xf32> to vector<2x16xbf16>
    %c0_71 = arith.constant 0 : index
    %c0_72 = arith.constant 0 : index
    %140 = vector.load %arg12[%c0_71, %c0_72] : memref<16x128xbf16, #tpu.memory_space<vmem>>, vector<16x128xbf16>
    %cst_73 = arith.constant dense<0.000000e+00> : vector<2x128xf32>
    %141 = tpu.matmul %139, %140, %cst_73 {dimension_numbers = #tpu.dot_dimension_numbers<[1], [0], [0], [1], [0, 0, 1, 1], [], []>} : vector<2x16xbf16>, vector<16x128xbf16>, vector<2x128xf32> -> vector<2x128xf32>
    %c0_74 = arith.constant 0 : index
    %c0_75 = arith.constant 0 : index
    %142 = vector.load %arg13[%c0_74, %c0_75] : memref<1x128xf32, #tpu.memory_space<vmem>>, vector<1x128xf32>
    %143 = vector.broadcast %142 : vector<1x128xf32> to vector<2x128xf32>
    %144 = arith.addf %141, %143 : vector<2x128xf32>
    %c0_76 = arith.constant 0 : index
    %c0_77 = arith.constant 0 : index
    %145 = vector.load %arg14[%c0_76, %c0_77] : memref<2x128xf32, #tpu.memory_space<vmem>>, vector<2x128xf32>
    tpu.vector_store %arg14[%c0_76, %c0_77], %144 {strides = array<i32>} : memref<2x128xf32, #tpu.memory_space<vmem>>, vector<2x128xf32>,
    return
  }
  func.func @transform_0(%arg0: i32) -> (i32, i32, i32) {
    %c0_i32 = arith.constant 0 : i32
    %c0_i32_0 = arith.constant 0 : i32
    %c0_i32_1 = arith.constant 0 : i32
    %c0_i32_2 = arith.constant 0 : i32
    return %c0_i32, %c0_i32_0, %c0_i32_1 : i32, i32, i32
  }
  func.func @transform_1(%arg0: i32) -> (i32, i32, i32) {
    %c0_i32 = arith.constant 0 : i32
    %c0_i32_0 = arith.constant 0 : i32
    %c0_i32_1 = arith.constant 0 : i32
    %c0_i32_2 = arith.constant 0 : i32
    return %c0_i32, %c0_i32_0, %c0_i32_1 : i32, i32, i32
  }
  func.func @transform_2(%arg0: i32) -> (i32, i32) {
    %c0_i32 = arith.constant 0 : i32
    %c0_i32_0 = arith.constant 0 : i32
    %c0_i32_1 = arith.constant 0 : i32
    return %c0_i32, %c0_i32_0 : i32, i32
  }
  func.func @transform_3(%arg0: i32) -> (i32, i32, i32) {
    %c0_i32 = arith.constant 0 : i32
    %c0_i32_0 = arith.constant 0 : i32
    %c0_i32_1 = arith.constant 0 : i32
    %c0_i32_2 = arith.constant 0 : i32
    return %c0_i32, %c0_i32_0, %c0_i32_1 : i32, i32, i32
  }
  func.func @transform_4(%arg0: i32) -> (i32, i32) {
    %c0_i32 = arith.constant 0 : i32
    %c0_i32_0 = arith.constant 0 : i32
    %c0_i32_1 = arith.constant 0 : i32
    return %c0_i32, %c0_i32_0 : i32, i32
  }
  func.func @transform_5(%arg0: i32) -> (i32, i32, i32) {
    %c0_i32 = arith.constant 0 : i32
    %c0_i32_0 = arith.constant 0 : i32
    %c0_i32_1 = arith.constant 0 : i32
    %c0_i32_2 = arith.constant 0 : i32
    return %c0_i32, %c0_i32_0, %c0_i32_1 : i32, i32, i32
  }
  func.func @transform_6(%arg0: i32) -> (i32, i32) {
    %c0_i32 = arith.constant 0 : i32
    %c0_i32_0 = arith.constant 0 : i32
    %c0_i32_1 = arith.constant 0 : i32
    return %c0_i32, %c0_i32_0 : i32, i32
  }
  func.func @transform_7(%arg0: i32) -> (i32, i32) {
    %c0_i32 = arith.constant 0 : i32
    %c0_i32_0 = arith.constant 0 : i32
    %c0_i32_1 = arith.constant 0 : i32
    return %c0_i32, %c0_i32_0 : i32, i32
  }
  func.func @transform_8(%arg0: i32) -> (i32, i32) {
    %c0_i32 = arith.constant 0 : i32
    %c0_i32_0 = arith.constant 0 : i32
    %c0_i32_1 = arith.constant 0 : i32
    return %c0_i32, %c0_i32_0 : i32, i32
  }
  func.func @transform_9(%arg0: i32) -> (i32, i32) {
    %c0_i32 = arith.constant 0 : i32
    %c0_i32_0 = arith.constant 0 : i32
    %c0_i32_1 = arith.constant 0 : i32
    return %c0_i32, %c0_i32_0 : i32, i32
  }
  func.func @transform_10(%arg0: i32) -> (i32, i32) {
    %c0_i32 = arith.constant 0 : i32
    %c0_i32_0 = arith.constant 0 : i32
    %c0_i32_1 = arith.constant 0 : i32
    return %c0_i32, %c0_i32_0 : i32, i32
  }
  func.func @transform_11(%arg0: i32) -> (i32, i32) {
    %c0_i32 = arith.constant 0 : i32
    %c0_i32_0 = arith.constant 0 : i32
    %c0_i32_1 = arith.constant 0 : i32
    return %c0_i32, %c0_i32_0 : i32, i32
  }
  func.func @transform_12(%arg0: i32) -> (i32, i32) {
    %c0_i32 = arith.constant 0 : i32
    %c0_i32_0 = arith.constant 0 : i32
    %c0_i32_1 = arith.constant 0 : i32
    return %c0_i32, %c0_i32_0 : i32, i32
  }
  func.func @transform_13(%arg0: i32) -> (i32, i32) {
    %c0_i32 = arith.constant 0 : i32
    %c0_i32_0 = arith.constant 0 : i32
    %c0_i32_1 = arith.constant 0 : i32
    return %c0_i32, %c0_i32_0 : i32, i32
  }
}

</mosaic_0001>

<llo_original>
// kernel: tpu_custom_call.1
$region0: #{tpu_custom_call.1}
  #allocation0 [shape = 'u32[]', space=smem, size = 0x4, offset = 0x4, fixed_abs, tag = 'smem constant byte address 0x4 - core index']
  #allocation1 [shape = 'u32[144,128]{1,0:T(1,128)}', space=vmem, size = 0x12000, scoped, tag = 'internal scratch']
  %s0 = inlined_call_operand.hbm [shape: f32[2,4,16], index: 0, kind: input, shape index: {}]
  %s1 = inlined_call_operand.hbm [shape: f32[2,4,32], index: 1, kind: input, shape index: {}]
  %s2 = inlined_call_operand.vmem [shape: f32[1,32], index: 2, kind: input, shape index: {}]
  %s3 = inlined_call_operand.vmem [shape: bf16[2,32,32], index: 3, kind: input, shape index: {}]
  %s4 = inlined_call_operand.vmem [shape: f32[1,32], index: 4, kind: input, shape index: {}]
  %s5 = inlined_call_operand.vmem [shape: bf16[2,32,64], index: 5, kind: input, shape index: {}]
  %s6 = inlined_call_operand.hbm [shape: f32[1,64], index: 6, kind: input, shape index: {}]
  %s7 = inlined_call_operand.vmem [shape: bf16[64,32], index: 7, kind: input, shape index: {}]
  %s8 = inlined_call_operand.vmem [shape: f32[1,32], index: 8, kind: input, shape index: {}]
  %s9 = inlined_call_operand.vmem [shape: bf16[32,16], index: 9, kind: input, shape index: {}]
  %s10 = inlined_call_operand.vmem [shape: f32[1,16], index: 10, kind: input, shape index: {}]
  %s11 = inlined_call_operand.vmem [shape: bf16[16,128], index: 11, kind: input, shape index: {}]
  %s12 = inlined_call_operand.vmem [shape: f32[1,128], index: 12, kind: input, shape index: {}]
  %s13 = inlined_call_operand.hbm [shape: f32[2,128], index: 13, kind: output, shape index: {}]
  %s14 = sld [smem:[#allocation0]]
  $region74: #{tpu_custom_call.1} parent=0
    _
  %s16 = ssub.s32 1, %s14
  %s17 = scalar_select 0, %s16, %s14
  $region1: #{tpu_custom_call.1} parent=0
    #allocation2 [shape = 'u8[4096]{0}', space=vmem, size = 0x1000, scoped, tag = 'input window, operand 0, single buffered']
    #allocation3 [shape = 's32[1]{0}', space=sflag, size = 0x4, scoped, tag = 'scoped memory for tpu_custom_call.1']
    #allocation4 [shape = 's32[1]{0}', space=sflag, size = 0x4, scoped, tag = 'scoped memory for tpu_custom_call.1']
    #allocation5 [shape = 'u8[4096]{0}', space=vmem, size = 0x1000, scoped, tag = 'input window, operand 1, single buffered']
    #allocation6 [shape = 's32[1]{0}', space=sflag, size = 0x4, scoped, tag = 'scoped memory for tpu_custom_call.1']
    #allocation7 [shape = 'u8[512]{0}', space=vmem, size = 0x400, scoped, tag = 'input window, operand 6, single buffered']
    #allocation8 [shape = 'u8[1024]{0}', space=vmem, size = 0x400, scoped, tag = 'output window, operand 0, single buffered']
    %18 = vsyncpa [#allocation3], 0
    %19 = vsyncpa [#allocation6], 0
    %20 = vsyncpa [#allocation4], 0
    // Predicated region
    $region2: #{tpu_custom_call.1} parent=1 // pred_check
      _
    $region3: #{tpu_custom_call.1} parent=1 // pred_check_branch
      %22 = sbr.rel (0) target = $region5
    $region4: #{tpu_custom_call.1} parent=1 // pred_region
      %s24 = ssub.s32 128, 128
      %25 = vsyncadd [#allocation3], %s24
      %s26 = sshll.u32 [#allocation2], 4
      %s27 = int_to_ptr.vmem [resolvable:$true] %s26
      %32 = dma.hbm_to_vmem [thread:$0]  %s0, 128, %s27, [#allocation3], 64, 64, 4
    $region5: #{tpu_custom_call.1} parent=1 // pred_fallthru
      _
    // Predicated region
    $region6: #{tpu_custom_call.1} parent=1 // pred_check
      _
    $region7: #{tpu_custom_call.1} parent=1 // pred_check_branch
      %34 = sbr.rel (0) target = $region9
    $region8: #{tpu_custom_call.1} parent=1 // pred_region
      %s36 = ssub.s32 128, 128
      %37 = vsyncadd [#allocation6], %s36
      %s38 = sshll.u32 [#allocation5], 4
      %s39 = int_to_ptr.vmem [resolvable:$true] %s38
      %44 = dma.hbm_to_vmem [thread:$0]  %s1, 128, %s39, [#allocation6], 64, 64, 4
    $region9: #{tpu_custom_call.1} parent=1 // pred_fallthru
      _
    // Predicated region
    $region10: #{tpu_custom_call.1} parent=1 // pred_check
      _
    $region11: #{tpu_custom_call.1} parent=1 // pred_check_branch
      %46 = sbr.rel (0) target = $region13
    $region12: #{tpu_custom_call.1} parent=1 // pred_region
      _
    $region13: #{tpu_custom_call.1} parent=1 // pred_fallthru
      _
    // Predicated region
    $region14: #{tpu_custom_call.1} parent=1 // pred_check
      _
    $region15: #{tpu_custom_call.1} parent=1 // pred_check_branch
      %48 = sbr.rel (0) target = $region17
    $region16: #{tpu_custom_call.1} parent=1 // pred_region
      _
    $region17: #{tpu_custom_call.1} parent=1 // pred_fallthru
      _
    // Predicated region
    $region18: #{tpu_custom_call.1} parent=1 // pred_check
      _
    $region19: #{tpu_custom_call.1} parent=1 // pred_check_branch
      %50 = sbr.rel (0) target = $region21
    $region20: #{tpu_custom_call.1} parent=1 // pred_region
      _
    $region21: #{tpu_custom_call.1} parent=1 // pred_fallthru
      _
    // Predicated region
    $region22: #{tpu_custom_call.1} parent=1 // pred_check
      _
    $region23: #{tpu_custom_call.1} parent=1 // pred_check_branch
      %52 = sbr.rel (0) target = $region25
    $region24: #{tpu_custom_call.1} parent=1 // pred_region
      _
    $region25: #{tpu_custom_call.1} parent=1 // pred_fallthru
      _
    // Predicated region
    $region26: #{tpu_custom_call.1} parent=1 // pred_check
      _
    $region27: #{tpu_custom_call.1} parent=1 // pred_check_branch
      %54 = sbr.rel (0) target = $region29
    $region28: #{tpu_custom_call.1} parent=1 // pred_region
      %s56 = ssub.s32 16, 16
      %57 = vsyncadd [#allocation6], %s56
      %s59 = sshll.u32 [#allocation7], 4
      %s60 = int_to_ptr.vmem [resolvable:$true] %s59
      %62 = dma.hbm_to_vmem [thread:$0]  %s6, 16, %s60, [#allocation6]
    $region29: #{tpu_custom_call.1} parent=1 // pred_fallthru
      _
    // Predicated region
    $region30: #{tpu_custom_call.1} parent=1 // pred_check
      _
    $region31: #{tpu_custom_call.1} parent=1 // pred_check_branch
      %64 = sbr.rel (0) target = $region33
    $region32: #{tpu_custom_call.1} parent=1 // pred_region
      _
    $region33: #{tpu_custom_call.1} parent=1 // pred_fallthru
      _
    // Predicated region
    $region34: #{tpu_custom_call.1} parent=1 // pred_check
      _
    $region35: #{tpu_custom_call.1} parent=1 // pred_check_branch
      %66 = sbr.rel (0) target = $region37
    $region36: #{tpu_custom_call.1} parent=1 // pred_region
      _
    $region37: #{tpu_custom_call.1} parent=1 // pred_fallthru
      _
    // Predicated region
    $region38: #{tpu_custom_call.1} parent=1 // pred_check
      _
    $region39: #{tpu_custom_call.1} parent=1 // pred_check_branch
      %68 = sbr.rel (0) target = $region41
    $region40: #{tpu_custom_call.1} parent=1 // pred_region
      _
    $region41: #{tpu_custom_call.1} parent=1 // pred_fallthru
      _
    // Predicated region
    $region42: #{tpu_custom_call.1} parent=1 // pred_check
      _
    $region43: #{tpu_custom_call.1} parent=1 // pred_check_branch
      %70 = sbr.rel (0) target = $region45
    $region44: #{tpu_custom_call.1} parent=1 // pred_region
      _
    $region45: #{tpu_custom_call.1} parent=1 // pred_fallthru
      _
    // Predicated region
    $region46: #{tpu_custom_call.1} parent=1 // pred_check
      _
    $region47: #{tpu_custom_call.1} parent=1 // pred_check_branch
      %72 = sbr.rel (0) target = $region49
    $region48: #{tpu_custom_call.1} parent=1 // pred_region
      _
    $region49: #{tpu_custom_call.1} parent=1 // pred_fallthru
      _
    // Predicated region
    $region50: #{tpu_custom_call.1} parent=1 // pred_check
      _
    $region51: #{tpu_custom_call.1} parent=1 // pred_check_branch
      %74 = sbr.rel (0) target = $region53
    $region52: #{tpu_custom_call.1} parent=1 // pred_region
      _
    $region53: #{tpu_custom_call.1} parent=1 // pred_fallthru
      _
    // Predicated region
    $region54: #{tpu_custom_call.1} parent=1 // pred_check
      _
    $region55: #{tpu_custom_call.1} parent=1 // pred_check_branch
      %76 = sbr.rel (0) target = $region57
    $region56: #{tpu_custom_call.1} parent=1 // pred_region
      %77 = dma.done [#allocation3], 128
    $region57: #{tpu_custom_call.1} parent=1 // pred_fallthru
      _
    // Predicated region
    $region58: #{tpu_custom_call.1} parent=1 // pred_check
      _
    $region59: #{tpu_custom_call.1} parent=1 // pred_check_branch
      %79 = sbr.rel (0) target = $region61
    $region60: #{tpu_custom_call.1} parent=1 // pred_region
      %80 = dma.done [#allocation6], 128
    $region61: #{tpu_custom_call.1} parent=1 // pred_fallthru
      _
    // Predicated region
    $region62: #{tpu_custom_call.1} parent=1 // pred_check
      _
    $region63: #{tpu_custom_call.1} parent=1 // pred_check_branch
      %82 = sbr.rel (0) target = $region65
    $region64: #{tpu_custom_call.1} parent=1 // pred_region
      %83 = dma.done [#allocation6], 16
    $region65: #{tpu_custom_call.1} parent=1 // pred_fallthru
      _
    %v85 = vld [vmem:[#allocation5] sm:$0xf]
    %v86 = vld [vmem:[#allocation5 + $0x4] sm:$0xf]
    %v87 = vld [vmem:[#allocation2] sm:$0xf]
    %v88 = vtanh.pop %v87
    %v89 = vadd.f32 %v88, 0.0
    %v90 = vrcp.pop 2.0
    %v91 = vmul.f32 %v89, %v90
    %v92 = vmul.f32 %v88, 1.5
    %v93 = vadd.f32 %v92, 0.0
    %v94 = vmul.f32 %v93, %v91
    %v95 = vadd.f32 %v94, -0.375
    %96 = vxpose.xlu0.b32.start [1/16] %v95, 128
    %97 = vxpose.xlu0.b32.cont [2/16] 0.0, 128
    %98 = vxpose.xlu0.b32.cont [3/16] 0.0, 128
    %99 = vxpose.xlu0.b32.cont [4/16] 0.0, 128
    %100 = vxpose.xlu0.b32.cont [5/16] 0.0, 128
    %101 = vxpose.xlu0.b32.cont [6/16] 0.0, 128
    %102 = vxpose.xlu0.b32.cont [7/16] 0.0, 128
    %103 = vxpose.xlu0.b32.cont [8/16] 0.0, 128
    %104 = vxpose.xlu0.b32.cont [9/16] 0.0, 128
    %105 = vxpose.xlu0.b32.cont [10/16] 0.0, 128
    %106 = vxpose.xlu0.b32.cont [11/16] 0.0, 128
    %107 = vxpose.xlu0.b32.cont [12/16] 0.0, 128
    %108 = vxpose.xlu0.b32.cont [13/16] 0.0, 128
    %109 = vxpose.xlu0.b32.cont [14/16] 0.0, 128
    %110 = vxpose.xlu0.b32.cont [15/16] 0.0, 128
    %111 = vxpose.xlu0.b32.end [16/16] 0.0, 128
    %v112 = vpop.trf.xlu0
    %v113 = vpop.trf.xlu0
    %v114 = vpop.trf.xlu0
    %v115 = vpop.trf.xlu0
    %v116 = vpop.trf.xlu0
    %v117 = vpop.trf.xlu0
    %v118 = vpop.trf.xlu0
    %v119 = vpop.trf.xlu0
    %v120 = vpop.trf.xlu0
    %v121 = vpop.trf.xlu0
    %v122 = vpop.trf.xlu0
    %v123 = vpop.trf.xlu0
    %v124 = vpop.trf.xlu0
    %v125 = vpop.trf.xlu0
    %v126 = vpop.trf.xlu0
    %v127 = vpop.trf.xlu0
    %vm128 = vcmask 31744
    %v130 = vsel %vm128, %v112, 0
    %v133 = vsel %vm128, %v113, 0
    %vm135 = vcmask 1043456
    %v137 = vsel %vm135, %v86, 0
    %139 = vmatprep.subr.mxu0 0.0
    %140 = vmatpush1.msra.mxu0 %v137
    %141 = vmatprep.subr.mxu0 0.0
    %142 = vmatpush1.msra.mxu0 0.0
    %143 = vmatprep.subr.mxu0 0.0
    %144 = vmatpush1.msra.mxu0 0.0
    %145 = vmatprep.subr.mxu0 0.0
    %146 = vmatpush1.msra.mxu0 0.0
    %147 = vmatprep.subr.mxu0 0.0
    %148 = vmatpush1.msra.mxu0 0.0
    %149 = vmatprep.subr.mxu0 0.0
    %150 = vmatpush1.msra.mxu0 0.0
    %151 = vmatprep.subr.mxu0 0.0
    %152 = vmatpush1.msra.mxu0 0.0
    %153 = vmatprep.subr.mxu0 0.0
    %154 = vmatpush1.msra.mxu0 0.0
    %155 = vmatprep.subr.mxu0 0.0
    %156 = vmatpush1.msra.mxu0 0.0
    %157 = vmatprep.subr.mxu0 0.0
    %158 = vmatpush1.msra.mxu0 0.0
    %159 = vmatprep.subr.mxu0 0.0
    %160 = vmatpush1.msra.mxu0 0.0
    %161 = vmatprep.subr.mxu0 0.0
    %162 = vmatpush1.msra.mxu0 0.0
    %163 = vmatprep.subr.mxu0 0.0
    %164 = vmatpush1.msra.mxu0 0.0
    %165 = vmatprep.subr.mxu0 0.0
    %166 = vmatpush1.msra.mxu0 0.0
    %167 = vmatprep.subr.mxu0 0.0
    %168 = vmatpush1.msra.mxu0 0.0
    %169 = vmatprep.subr.mxu0 0.0
    %170 = vmatpush1.msra.mxu0 0.0
    %171 = vmatprep.subr.mxu0 0.0
    %172 = vmatpush1.msra.mxu0 0.0
    %173 = vmatprep.subr.mxu0 0.0
    %174 = vmatpush1.msra.mxu0 0.0
    %175 = vmatprep.subr.mxu0 0.0
    %176 = vmatpush1.msra.mxu0 0.0
    %177 = vmatprep.subr.mxu0 0.0
    %178 = vmatpush1.msra.mxu0 0.0
    %179 = vmatprep.subr.mxu0 0.0
    %180 = vmatpush1.msra.mxu0 0.0
    %181 = vmatprep.subr.mxu0 0.0
    %182 = vmatpush1.msra.mxu0 0.0
    %183 = vmatprep.subr.mxu0 0.0
    %184 = vmatpush1.msra.mxu0 0.0
    %185 = vmatprep.subr.mxu0 0.0
    %186 = vmatpush1.msra.mxu0 0.0
    %187 = vmatprep.subr.mxu0 0.0
    %188 = vmatpush1.msra.mxu0 0.0
    %189 = vmatprep.subr.mxu0 0.0
    %190 = vmatpush1.msra.mxu0 0.0
    %191 = vmatprep.subr.mxu0 0.0
    %192 = vmatpush1.msra.mxu0 0.0
    %193 = vmatprep.subr.mxu0 0.0
    %194 = vmatpush1.msra.mxu0 0.0
    %195 = vmatprep.subr.mxu0 0.0
    %196 = vmatpush1.msra.mxu0 0.0
    %197 = vmatprep.subr.mxu0 0.0
    %198 = vmatpush1.msra.mxu0 0.0
    %199 = vmatprep.subr.mxu0 0.0
    %200 = vmatpush1.msra.mxu0 0.0
    %201 = vmatprep.subr.mxu0 0.0
    %202 = vmatpush1.msra.mxu0 0.0
    %203 = vmatprep.mubr.f32.mxu0 0.0
    %204 = vmatmul.mubr.f32.gmra.mrb[0].mxu0 %v130
    %v205 = vpop.f32.mrb[0].mxu0
    %v206 = vadd.f32 0.0, %v205
    %v207 = vpop.f32.mrb[0].mxu0
    %208 = vmatprep.mubr.f32.mxu0 0.0
    %209 = vmatmul.mubr.f32.gmra.mrb[0].mxu0 %v133
    %v210 = vpop.f32.mrb[0].mxu0
    %v211 = vadd.f32 0.0, %v210
    %v212 = vpop.f32.mrb[0].mxu0
    %213 = vdwg.mxu0
    %214 = vxpose.xlu0.b32.start [1/16] %v91, 128
    %215 = vxpose.xlu0.b32.cont [2/16] 0.0, 128
    %216 = vxpose.xlu0.b32.cont [3/16] 0.0, 128
    %217 = vxpose.xlu0.b32.cont [4/16] 0.0, 128
    %218 = vxpose.xlu0.b32.cont [5/16] 0.0, 128
    %219 = vxpose.xlu0.b32.cont [6/16] 0.0, 128
    %220 = vxpose.xlu0.b32.cont [7/16] 0.0, 128
    %221 = vxpose.xlu0.b32.cont [8/16] 0.0, 128
    %222 = vxpose.xlu0.b32.cont [9/16] 0.0, 128
    %223 = vxpose.xlu0.b32.cont [10/16] 0.0, 128
    %224 = vxpose.xlu0.b32.cont [11/16] 0.0, 128
    %225 = vxpose.xlu0.b32.cont [12/16] 0.0, 128
    %226 = vxpose.xlu0.b32.cont [13/16] 0.0, 128
    %227 = vxpose.xlu0.b32.cont [14/16] 0.0, 128
    %228 = vxpose.xlu0.b32.cont [15/16] 0.0, 128
    %229 = vxpose.xlu0.b32.end [16/16] 0.0, 128
    %v230 = vpop.trf.xlu0
    %v231 = vpop.trf.xlu0
    %v232 = vpop.trf.xlu0
    %v233 = vpop.trf.xlu0
    %v234 = vpop.trf.xlu0
    %v235 = vpop.trf.xlu0
    %v236 = vpop.trf.xlu0
    %v237 = vpop.trf.xlu0
    %v238 = vpop.trf.xlu0
    %v239 = vpop.trf.xlu0
    %v240 = vpop.trf.xlu0
    %v241 = vpop.trf.xlu0
    %v242 = vpop.trf.xlu0
    %v243 = vpop.trf.xlu0
    %v244 = vpop.trf.xlu0
    %v245 = vpop.trf.xlu0
    %v247 = vsel %vm128, %v230, 0
    %v250 = vsel %vm128, %v231, 0
    %v253 = vsel %vm135, %v85, 0
    %255 = vmatprep.subr.mxu0 0.0
    %256 = vmatpush1.msra.mxu0 %v253
    %257 = vmatprep.subr.mxu0 0.0
    %258 = vmatpush1.msra.mxu0 0.0
    %259 = vmatprep.subr.mxu0 0.0
    %260 = vmatpush1.msra.mxu0 0.0
    %261 = vmatprep.subr.mxu0 0.0
    %262 = vmatpush1.msra.mxu0 0.0
    %263 = vmatprep.subr.mxu0 0.0
    %264 = vmatpush1.msra.mxu0 0.0
    %265 = vmatprep.subr.mxu0 0.0
    %266 = vmatpush1.msra.mxu0 0.0
    %267 = vmatprep.subr.mxu0 0.0
    %268 = vmatpush1.msra.mxu0 0.0
    %269 = vmatprep.subr.mxu0 0.0
    %270 = vmatpush1.msra.mxu0 0.0
    %271 = vmatprep.subr.mxu0 0.0
    %272 = vmatpush1.msra.mxu0 0.0
    %273 = vmatprep.subr.mxu0 0.0
    %274 = vmatpush1.msra.mxu0 0.0
    %275 = vmatprep.subr.mxu0 0.0
    %276 = vmatpush1.msra.mxu0 0.0
    %277 = vmatprep.subr.mxu0 0.0
    %278 = vmatpush1.msra.mxu0 0.0
    %279 = vmatprep.subr.mxu0 0.0
    %280 = vmatpush1.msra.mxu0 0.0
    %281 = vmatprep.subr.mxu0 0.0
    %282 = vmatpush1.msra.mxu0 0.0
    %283 = vmatprep.subr.mxu0 0.0
    %284 = vmatpush1.msra.mxu0 0.0
    %285 = vmatprep.subr.mxu0 0.0
    %286 = vmatpush1.msra.mxu0 0.0
    %287 = vmatprep.subr.mxu0 0.0
    %288 = vmatpush1.msra.mxu0 0.0
    %289 = vmatprep.subr.mxu0 0.0
    %290 = vmatpush1.msra.mxu0 0.0
    %291 = vmatprep.subr.mxu0 0.0
    %292 = vmatpush1.msra.mxu0 0.0
    %293 = vmatprep.subr.mxu0 0.0
    %294 = vmatpush1.msra.mxu0 0.0
    %295 = vmatprep.subr.mxu0 0.0
    %296 = vmatpush1.msra.mxu0 0.0
    %297 = vmatprep.subr.mxu0 0.0
    %298 = vmatpush1.msra.mxu0 0.0
    %299 = vmatprep.subr.mxu0 0.0
    %300 = vmatpush1.msra.mxu0 0.0
    %301 = vmatprep.subr.mxu0 0.0
    %302 = vmatpush1.msra.mxu0 0.0
    %303 = vmatprep.subr.mxu0 0.0
    %304 = vmatpush1.msra.mxu0 0.0
    %305 = vmatprep.subr.mxu0 0.0
    %306 = vmatpush1.msra.mxu0 0.0
    %307 = vmatprep.subr.mxu0 0.0
    %308 = vmatpush1.msra.mxu0 0.0
    %309 = vmatprep.subr.mxu0 0.0
    %310 = vmatpush1.msra.mxu0 0.0
    %311 = vmatprep.subr.mxu0 0.0
    %312 = vmatpush1.msra.mxu0 0.0
    %313 = vmatprep.subr.mxu0 0.0
    %314 = vmatpush1.msra.mxu0 0.0
    %315 = vmatprep.subr.mxu0 0.0
    %316 = vmatpush1.msra.mxu0 0.0
    %317 = vmatprep.subr.mxu0 0.0
    %318 = vmatpush1.msra.mxu0 0.0
    %319 = vmatprep.mubr.f32.mxu0 0.0
    %320 = vmatmul.mubr.f32.gmra.mrb[0].mxu0 %v247
    %v321 = vpop.f32.mrb[0].mxu0
    %v322 = vadd.f32 %v206, %v321
    %v323 = vpop.f32.mrb[0].mxu0
    %324 = vmatprep.mubr.f32.mxu0 0.0
    %325 = vmatmul.mubr.f32.gmra.mrb[0].mxu0 %v250
    %v326 = vpop.f32.mrb[0].mxu0
    %v327 = vadd.f32 %v211, %v326
    %v328 = vpop.f32.mrb[0].mxu0
    %329 = vdwg.mxu0
    %s330 = scalar_lea.vmem [#allocation2], 4
    %v331 = vld [vmem:[%s330] sm:$0xf]
    %v332 = vtanh.pop %v331
    %v333 = vadd.f32 %v332, 0.0
    %v334 = vmul.f32 %v333, %v90
    %v335 = vmul.f32 %v332, 1.5
    %v336 = vadd.f32 %v335, 0.0
    %v337 = vmul.f32 %v336, %v334
    %v338 = vadd.f32 %v337, -0.375
    %339 = vxpose.xlu0.b32.start [1/16] %v338, 128
    %340 = vxpose.xlu0.b32.cont [2/16] 0.0, 128
    %341 = vxpose.xlu0.b32.cont [3/16] 0.0, 128
    %342 = vxpose.xlu0.b32.cont [4/16] 0.0, 128
    %343 = vxpose.xlu0.b32.cont [5/16] 0.0, 128
    %344 = vxpose.xlu0.b32.cont [6/16] 0.0, 128
    %345 = vxpose.xlu0.b32.cont [7/16] 0.0, 128
    %346 = vxpose.xlu0.b32.cont [8/16] 0.0, 128
    %347 = vxpose.xlu0.b32.cont [9/16] 0.0, 128
    %348 = vxpose.xlu0.b32.cont [10/16] 0.0, 128
    %349 = vxpose.xlu0.b32.cont [11/16] 0.0, 128
    %350 = vxpose.xlu0.b32.cont [12/16] 0.0, 128
    %351 = vxpose.xlu0.b32.cont [13/16] 0.0, 128
    %352 = vxpose.xlu0.b32.cont [14/16] 0.0, 128
    %353 = vxpose.xlu0.b32.cont [15/16] 0.0, 128
    %354 = vxpose.xlu0.b32.end [16/16] 0.0, 128
    %v355 = vpop.trf.xlu0
    %v356 = vpop.trf.xlu0
    %v357 = vpop.trf.xlu0
    %v358 = vpop.trf.xlu0
    %v359 = vpop.trf.xlu0
    %v360 = vpop.trf.xlu0
    %v361 = vpop.trf.xlu0
    %v362 = vpop.trf.xlu0
    %v363 = vpop.trf.xlu0
    %v364 = vpop.trf.xlu0
    %v365 = vpop.trf.xlu0
    %v366 = vpop.trf.xlu0
    %v367 = vpop.trf.xlu0
    %v368 = vpop.trf.xlu0
    %v369 = vpop.trf.xlu0
    %v370 = vpop.trf.xlu0
    %v372 = vsel %vm128, %v355, 0
    %v375 = vsel %vm128, %v356, 0
    %377 = vmatprep.subr.mxu0 0.0
    %378 = vmatpush1.msra.mxu0 %v137
    %379 = vmatprep.subr.mxu0 0.0
    %380 = vmatpush1.msra.mxu0 0.0
    %381 = vmatprep.subr.mxu0 0.0
    %382 = vmatpush1.msra.mxu0 0.0
    %383 = vmatprep.subr.mxu0 0.0
    %384 = vmatpush1.msra.mxu0 0.0
    %385 = vmatprep.subr.mxu0 0.0
    %386 = vmatpush1.msra.mxu0 0.0
    %387 = vmatprep.subr.mxu0 0.0
    %388 = vmatpush1.msra.mxu0 0.0
    %389 = vmatprep.subr.mxu0 0.0
    %390 = vmatpush1.msra.mxu0 0.0
    %391 = vmatprep.subr.mxu0 0.0
    %392 = vmatpush1.msra.mxu0 0.0
    %393 = vmatprep.subr.mxu0 0.0
    %394 = vmatpush1.msra.mxu0 0.0
    %395 = vmatprep.subr.mxu0 0.0
    %396 = vmatpush1.msra.mxu0 0.0
    %397 = vmatprep.subr.mxu0 0.0
    %398 = vmatpush1.msra.mxu0 0.0
    %399 = vmatprep.subr.mxu0 0.0
    %400 = vmatpush1.msra.mxu0 0.0
    %401 = vmatprep.subr.mxu0 0.0
    %402 = vmatpush1.msra.mxu0 0.0
    %403 = vmatprep.subr.mxu0 0.0
    %404 = vmatpush1.msra.mxu0 0.0
    %405 = vmatprep.subr.mxu0 0.0
    %406 = vmatpush1.msra.mxu0 0.0
    %407 = vmatprep.subr.mxu0 0.0
    %408 = vmatpush1.msra.mxu0 0.0
    %409 = vmatprep.subr.mxu0 0.0
    %410 = vmatpush1.msra.mxu0 0.0
    %411 = vmatprep.subr.mxu0 0.0
    %412 = vmatpush1.msra.mxu0 0.0
    %413 = vmatprep.subr.mxu0 0.0
    %414 = vmatpush1.msra.mxu0 0.0
    %415 = vmatprep.subr.mxu0 0.0
    %416 = vmatpush1.msra.mxu0 0.0
    %417 = vmatprep.subr.mxu0 0.0
    %418 = vmatpush1.msra.mxu0 0.0
    %419 = vmatprep.subr.mxu0 0.0
    %420 = vmatpush1.msra.mxu0 0.0
    %421 = vmatprep.subr.mxu0 0.0
    %422 = vmatpush1.msra.mxu0 0.0
    %423 = vmatprep.subr.mxu0 0.0
    %424 = vmatpush1.msra.mxu0 0.0
    %425 = vmatprep.subr.mxu0 0.0
    %426 = vmatpush1.msra.mxu0 0.0
    %427 = vmatprep.subr.mxu0 0.0
    %428 = vmatpush1.msra.mxu0 0.0
    %429 = vmatprep.subr.mxu0 0.0
    %430 = vmatpush1.msra.mxu0 0.0
    %431 = vmatprep.subr.mxu0 0.0
    %432 = vmatpush1.msra.mxu0 0.0
    %433 = vmatprep.subr.mxu0 0.0
    %434 = vmatpush1.msra.mxu0 0.0
    %435 = vmatprep.subr.mxu0 0.0
    %436 = vmatpush1.msra.mxu0 0.0
    %437 = vmatprep.subr.mxu0 0.0
    %438 = vmatpush1.msra.mxu0 0.0
    %439 = vmatprep.subr.mxu0 0.0
    %440 = vmatpush1.msra.mxu0 0.0
    %441 = vmatprep.mubr.f32.mxu0 0.0
    %442 = vmatmul.mubr.f32.gmra.mrb[0].mxu0 %v372
    %v443 = vpop.f32.mrb[0].mxu0
    %v444 = vadd.f32 0.0, %v443
    %v445 = vpop.f32.mrb[0].mxu0
    %446 = vmatprep.mubr.f32.mxu0 0.0
    %447 = vmatmul.mubr.f32.gmra.mrb[0].mxu0 %v375
    %v448 = vpop.f32.mrb[0].mxu0
    %v449 = vadd.f32 0.0, %v448
    %v450 = vpop.f32.mrb[0].mxu0
    %451 = vdwg.mxu0
    %452 = vxpose.xlu0.b32.start [1/16] %v334, 128
    %453 = vxpose.xlu0.b32.cont [2/16] 0.0, 128
    %454 = vxpose.xlu0.b32.cont [3/16] 0.0, 128
    %455 = vxpose.xlu0.b32.cont [4/16] 0.0, 128
    %456 = vxpose.xlu0.b32.cont [5/16] 0.0, 128
    %457 = vxpose.xlu0.b32.cont [6/16] 0.0, 128
    %458 = vxpose.xlu0.b32.cont [7/16] 0.0, 128
    %459 = vxpose.xlu0.b32.cont [8/16] 0.0, 128
    %460 = vxpose.xlu0.b32.cont [9/16] 0.0, 128
    %461 = vxpose.xlu0.b32.cont [10/16] 0.0, 128
    %462 = vxpose.xlu0.b32.cont [11/16] 0.0, 128
    %463 = vxpose.xlu0.b32.cont [12/16] 0.0, 128
    %464 = vxpose.xlu0.b32.cont [13/16] 0.0, 128
    %465 = vxpose.xlu0.b32.cont [14/16] 0.0, 128
    %466 = vxpose.xlu0.b32.cont [15/16] 0.0, 128
    %467 = vxpose.xlu0.b32.end [16/16] 0.0, 128
    %v468 = vpop.trf.xlu0
    %v469 = vpop.trf.xlu0
    %v470 = vpop.trf.xlu0
    %v471 = vpop.trf.xlu0
    %v472 = vpop.trf.xlu0
    %v473 = vpop.trf.xlu0
    %v474 = vpop.trf.xlu0
    %v475 = vpop.trf.xlu0
    %v476 = vpop.trf.xlu0
    %v477 = vpop.trf.xlu0
    %v478 = vpop.trf.xlu0
    %v479 = vpop.trf.xlu0
    %v480 = vpop.trf.xlu0
    %v481 = vpop.trf.xlu0
    %v482 = vpop.trf.xlu0
    %v483 = vpop.trf.xlu0
    %v485 = vsel %vm128, %v468, 0
    %v488 = vsel %vm128, %v469, 0
    %490 = vmatprep.subr.mxu0 0.0
    %491 = vmatpush1.msra.mxu0 %v253
    %492 = vmatprep.subr.mxu0 0.0
    %493 = vmatpush1.msra.mxu0 0.0
    %494 = vmatprep.subr.mxu0 0.0
    %495 = vmatpush1.msra.mxu0 0.0
    %496 = vmatprep.subr.mxu0 0.0
    %497 = vmatpush1.msra.mxu0 0.0
    %498 = vmatprep.subr.mxu0 0.0
    %499 = vmatpush1.msra.mxu0 0.0
    %500 = vmatprep.subr.mxu0 0.0
    %501 = vmatpush1.msra.mxu0 0.0
    %502 = vmatprep.subr.mxu0 0.0
    %503 = vmatpush1.msra.mxu0 0.0
    %504 = vmatprep.subr.mxu0 0.0
    %505 = vmatpush1.msra.mxu0 0.0
    %506 = vmatprep.subr.mxu0 0.0
    %507 = vmatpush1.msra.mxu0 0.0
    %508 = vmatprep.subr.mxu0 0.0
    %509 = vmatpush1.msra.mxu0 0.0
    %510 = vmatprep.subr.mxu0 0.0
    %511 = vmatpush1.msra.mxu0 0.0
    %512 = vmatprep.subr.mxu0 0.0
    %513 = vmatpush1.msra.mxu0 0.0
    %514 = vmatprep.subr.mxu0 0.0
    %515 = vmatpush1.msra.mxu0 0.0
    %516 = vmatprep.subr.mxu0 0.0
    %517 = vmatpush1.msra.mxu0 0.0
    %518 = vmatprep.subr.mxu0 0.0
    %519 = vmatpush1.msra.mxu0 0.0
    %520 = vmatprep.subr.mxu0 0.0
    %521 = vmatpush1.msra.mxu0 0.0
    %522 = vmatprep.subr.mxu0 0.0
    %523 = vmatpush1.msra.mxu0 0.0
    %524 = vmatprep.subr.mxu0 0.0
    %525 = vmatpush1.msra.mxu0 0.0
    %526 = vmatprep.subr.mxu0 0.0
    %527 = vmatpush1.msra.mxu0 0.0
    %528 = vmatprep.subr.mxu0 0.0
    %529 = vmatpush1.msra.mxu0 0.0
    %530 = vmatprep.subr.mxu0 0.0
    %531 = vmatpush1.msra.mxu0 0.0
    %532 = vmatprep.subr.mxu0 0.0
    %533 = vmatpush1.msra.mxu0 0.0
    %534 = vmatprep.subr.mxu0 0.0
    %535 = vmatpush1.msra.mxu0 0.0
    %536 = vmatprep.subr.mxu0 0.0
    %537 = vmatpush1.msra.mxu0 0.0
    %538 = vmatprep.subr.mxu0 0.0
    %539 = vmatpush1.msra.mxu0 0.0
    %540 = vmatprep.subr.mxu0 0.0
    %541 = vmatpush1.msra.mxu0 0.0
    %542 = vmatprep.subr.mxu0 0.0
    %543 = vmatpush1.msra.mxu0 0.0
    %544 = vmatprep.subr.mxu0 0.0
    %545 = vmatpush1.msra.mxu0 0.0
    %546 = vmatprep.subr.mxu0 0.0
    %547 = vmatpush1.msra.mxu0 0.0
    %548 = vmatprep.subr.mxu0 0.0
    %549 = vmatpush1.msra.mxu0 0.0
    %550 = vmatprep.subr.mxu0 0.0
    %551 = vmatpush1.msra.mxu0 0.0
    %552 = vmatprep.subr.mxu0 0.0
    %553 = vmatpush1.msra.mxu0 0.0
    %554 = vmatprep.mubr.f32.mxu0 0.0
    %555 = vmatmul.mubr.f32.gmra.mrb[0].mxu0 %v485
    %v556 = vpop.f32.mrb[0].mxu0
    %v557 = vadd.f32 %v444, %v556
    %v558 = vpop.f32.mrb[0].mxu0
    %559 = vmatprep.mubr.f32.mxu0 0.0
    %560 = vmatmul.mubr.f32.gmra.mrb[0].mxu0 %v488
    %v561 = vpop.f32.mrb[0].mxu0
    %v562 = vadd.f32 %v449, %v561
    %v563 = vpop.f32.mrb[0].mxu0
    %564 = vdwg.mxu0
    %v565 = vld [vmem:[%s2] sm:$0x1]
    %v567 = vlaneseq
    %v568 = vshrl.u32 %v567, 7
    %v569 = vsub.s32 0, %v568
    %v570 = vrot.slane %v565, %v569
    %v572 = vadd.f32 %v322, %v570
    %v573 = vadd.f32 %v327, %v570
    %v574 = vadd.f32 %v557, %v570
    %v575 = vadd.f32 %v562, %v570
    %v576 = vtanh.pop %v572
    %v577 = vtanh.pop %v573
    %v578 = vtanh.pop %v574
    %v579 = vtanh.pop %v575
    %v580 = vld [vmem:[%s3] sm:$0xf]
    %v581 = vld [vmem:[%s3 + $0x4] sm:$0xf]
    %v582 = vld [vmem:[%s3 + $0x8] sm:$0xf]
    %v583 = vld [vmem:[%s3 + $0xc] sm:$0xf]
    %v584 = vld [vmem:[%s3 + $0x10] sm:$0xf]
    %v585 = vld [vmem:[%s3 + $0x14] sm:$0xf]
    %v586 = vld [vmem:[%s3 + $0x18] sm:$0xf]
    %v587 = vld [vmem:[%s3 + $0x1c] sm:$0xf]
    %v588 = vadd.f32 %v576, 0.0
    %v589 = vadd.f32 %v577, 0.0
    %v590 = vadd.f32 %v578, 0.0
    %v591 = vadd.f32 %v579, 0.0
    %v592 = vmul.f32 %v588, %v90
    %v593 = vmul.f32 %v589, %v90
    %v594 = vmul.f32 %v590, %v90
    %v595 = vmul.f32 %v591, %v90
    %v596 = vmul.f32 %v576, 1.5
    %v597 = vmul.f32 %v577, 1.5
    %v598 = vmul.f32 %v578, 1.5
    %v599 = vmul.f32 %v579, 1.5
    %v600 = vadd.f32 %v596, 0.0
    %v601 = vadd.f32 %v597, 0.0
    %v602 = vadd.f32 %v598, 0.0
    %v603 = vadd.f32 %v599, 0.0
    %v604 = vmul.f32 %v600, %v592
    %v605 = vmul.f32 %v601, %v593
    %v606 = vmul.f32 %v602, %v594
    %v607 = vmul.f32 %v603, %v595
    %v608 = vadd.f32 %v604, -0.375
    %v609 = vadd.f32 %v605, -0.375
    %v610 = vadd.f32 %v606, -0.375
    %v611 = vadd.f32 %v607, -0.375
    %v612 = vpack.c.bf16 %v593, %v592
    %v613 = vpack.c.bf16 %v595, %v594
    %v614 = vpack.c.bf16 %v609, %v608
    %v615 = vpack.c.bf16 %v611, %v610
    %v620 = vunpack.c.l.b16 %v584
    %v621 = vunpack.c.l.b16 %v585
    %v622 = vunpack.c.l.b16 %v586
    %v623 = vunpack.c.l.b16 %v587
    %v624 = vpack.c.b16 %v621, %v620
    %v625 = vpack.c.b16 %v623, %v622
    %vm628 = vcmask 261120
    %v630 = vsel %vm628, %v614, 0
    %v633 = vsel %vm628, %v615, 0
    %635 = vmatprep.subr.bf16.mxu0 0
    %636 = vmatpush1.bf16.msra.mxu0 %v624
    %637 = vmatprep.subr.bf16.mxu0 0
    %638 = vmatpush1.bf16.msra.mxu0 %v625
    %639 = vmatprep.subr.bf16.mxu0 0
    %640 = vmatpush1.bf16.msra.mxu0 0
    %641 = vmatprep.subr.bf16.mxu0 0
    %642 = vmatpush1.bf16.msra.mxu0 0
    %643 = vmatprep.subr.bf16.mxu0 0
    %644 = vmatpush1.bf16.msra.mxu0 0
    %645 = vmatprep.subr.bf16.mxu0 0
    %646 = vmatpush1.bf16.msra.mxu0 0
    %647 = vmatprep.subr.bf16.mxu0 0
    %648 = vmatpush1.bf16.msra.mxu0 0
    %649 = vmatprep.subr.bf16.mxu0 0
    %650 = vmatpush1.bf16.msra.mxu0 0
    %651 = vmatprep.subr.bf16.mxu0 0
    %652 = vmatpush1.bf16.msra.mxu0 0
    %653 = vmatprep.subr.bf16.mxu0 0
    %654 = vmatpush1.bf16.msra.mxu0 0
    %655 = vmatprep.subr.bf16.mxu0 0
    %656 = vmatpush1.bf16.msra.mxu0 0
    %657 = vmatprep.subr.bf16.mxu0 0
    %658 = vmatpush1.bf16.msra.mxu0 0
    %659 = vmatprep.subr.bf16.mxu0 0
    %660 = vmatpush1.bf16.msra.mxu0 0
    %661 = vmatprep.subr.bf16.mxu0 0
    %662 = vmatpush1.bf16.msra.mxu0 0
    %663 = vmatprep.subr.bf16.mxu0 0
    %664 = vmatpush1.bf16.msra.mxu0 0
    %665 = vmatprep.subr.bf16.mxu0 0
    %666 = vmatpush1.bf16.msra.mxu0 0
    %667 = vmatprep.mubr.bf16.mxu0 0
    %668 = vmatmul.mubr.bf16.gmra.mrb[0].mxu0 %v630
    %v669 = vpop.f32.mrb[0].mxu0
    %v670 = vadd.f32 0.0, %v669
    %v671 = vpop.f32.mrb[0].mxu0
    %v672 = vpop.f32.mrb[0].mxu0
    %v673 = vadd.f32 0.0, %v672
    %v674 = vpop.f32.mrb[0].mxu0
    %675 = vmatprep.mubr.bf16.mxu0 0
    %676 = vmatmul.mubr.bf16.gmra.mrb[0].mxu0 %v633
    %v677 = vpop.f32.mrb[0].mxu0
    %v678 = vadd.f32 0.0, %v677
    %v679 = vpop.f32.mrb[0].mxu0
    %v680 = vpop.f32.mrb[0].mxu0
    %v681 = vadd.f32 0.0, %v680
    %v682 = vpop.f32.mrb[0].mxu0
    %683 = vdwg.mxu0
    %v688 = vunpack.c.l.b16 %v580
    %v689 = vunpack.c.l.b16 %v581
    %v690 = vunpack.c.l.b16 %v582
    %v691 = vunpack.c.l.b16 %v583
    %v692 = vpack.c.b16 %v689, %v688
    %v693 = vpack.c.b16 %v691, %v690
    %v697 = vsel %vm628, %v612, 0
    %v700 = vsel %vm628, %v613, 0
    %702 = vmatprep.subr.bf16.mxu0 0
    %703 = vmatpush1.bf16.msra.mxu0 %v692
    %704 = vmatprep.subr.bf16.mxu0 0
    %705 = vmatpush1.bf16.msra.mxu0 %v693
    %706 = vmatprep.subr.bf16.mxu0 0
    %707 = vmatpush1.bf16.msra.mxu0 0
    %708 = vmatprep.subr.bf16.mxu0 0
    %709 = vmatpush1.bf16.msra.mxu0 0
    %710 = vmatprep.subr.bf16.mxu0 0
    %711 = vmatpush1.bf16.msra.mxu0 0
    %712 = vmatprep.subr.bf16.mxu0 0
    %713 = vmatpush1.bf16.msra.mxu0 0
    %714 = vmatprep.subr.bf16.mxu0 0
    %715 = vmatpush1.bf16.msra.mxu0 0
    %716 = vmatprep.subr.bf16.mxu0 0
    %717 = vmatpush1.bf16.msra.mxu0 0
    %718 = vmatprep.subr.bf16.mxu0 0
    %719 = vmatpush1.bf16.msra.mxu0 0
    %720 = vmatprep.subr.bf16.mxu0 0
    %721 = vmatpush1.bf16.msra.mxu0 0
    %722 = vmatprep.subr.bf16.mxu0 0
    %723 = vmatpush1.bf16.msra.mxu0 0
    %724 = vmatprep.subr.bf16.mxu0 0
    %725 = vmatpush1.bf16.msra.mxu0 0
    %726 = vmatprep.subr.bf16.mxu0 0
    %727 = vmatpush1.bf16.msra.mxu0 0
    %728 = vmatprep.subr.bf16.mxu0 0
    %729 = vmatpush1.bf16.msra.mxu0 0
    %730 = vmatprep.subr.bf16.mxu0 0
    %731 = vmatpush1.bf16.msra.mxu0 0
    %732 = vmatprep.subr.bf16.mxu0 0
    %733 = vmatpush1.bf16.msra.mxu0 0
    %734 = vmatprep.mubr.bf16.mxu0 0
    %735 = vmatmul.mubr.bf16.gmra.mrb[0].mxu0 %v697
    %v736 = vpop.f32.mrb[0].mxu0
    %v737 = vadd.f32 %v670, %v736
    %v738 = vpop.f32.mrb[0].mxu0
    %v739 = vpop.f32.mrb[0].mxu0
    %v740 = vadd.f32 %v673, %v739
    %v741 = vpop.f32.mrb[0].mxu0
    %742 = vmatprep.mubr.bf16.mxu0 0
    %743 = vmatmul.mubr.bf16.gmra.mrb[0].mxu0 %v700
    %v744 = vpop.f32.mrb[0].mxu0
    %v745 = vadd.f32 %v678, %v744
    %v746 = vpop.f32.mrb[0].mxu0
    %v747 = vpop.f32.mrb[0].mxu0
    %v748 = vadd.f32 %v681, %v747
    %v749 = vpop.f32.mrb[0].mxu0
    %750 = vdwg.mxu0
    %v751 = vld [vmem:[%s4] sm:$0x1]
    %v753 = vlaneseq
    %v754 = vshrl.u32 %v753, 7
    %v755 = vsub.s32 0, %v754
    %v756 = vrot.slane %v751, %v755
    %v758 = vadd.f32 %v737, %v756
    %v759 = vadd.f32 %v740, %v756
    %v760 = vadd.f32 %v745, %v756
    %v761 = vadd.f32 %v748, %v756
    %v762 = vtanh.pop %v758
    %v763 = vtanh.pop %v759
    %v764 = vtanh.pop %v760
    %v765 = vtanh.pop %v761
    %v766 = vld [vmem:[%s5] sm:$0xf]
    %v767 = vld [vmem:[%s5 + $0x4] sm:$0xf]
    %v768 = vld [vmem:[%s5 + $0x8] sm:$0xf]
    %v769 = vld [vmem:[%s5 + $0xc] sm:$0xf]
    %v770 = vld [vmem:[%s5 + $0x10] sm:$0xf]
    %v771 = vld [vmem:[%s5 + $0x14] sm:$0xf]
    %v772 = vld [vmem:[%s5 + $0x18] sm:$0xf]
    %v773 = vld [vmem:[%s5 + $0x1c] sm:$0xf]
    %v774 = vadd.f32 %v762, 0.0
    %v775 = vadd.f32 %v763, 0.0
    %v776 = vadd.f32 %v764, 0.0
    %v777 = vadd.f32 %v765, 0.0
    %v778 = vmul.f32 %v774, %v90
    %v779 = vmul.f32 %v775, %v90
    %v780 = vmul.f32 %v776, %v90
    %v781 = vmul.f32 %v777, %v90
    %v782 = vmul.f32 %v762, 1.5
    %v783 = vmul.f32 %v763, 1.5
    %v784 = vmul.f32 %v764, 1.5
    %v785 = vmul.f32 %v765, 1.5
    %v786 = vadd.f32 %v782, 0.0
    %v787 = vadd.f32 %v783, 0.0
    %v788 = vadd.f32 %v784, 0.0
    %v789 = vadd.f32 %v785, 0.0
    %v790 = vmul.f32 %v786, %v778
    %v791 = vmul.f32 %v787, %v779
    %v792 = vmul.f32 %v788, %v780
    %v793 = vmul.f32 %v789, %v781
    %v794 = vadd.f32 %v790, -0.375
    %v795 = vadd.f32 %v791, -0.375
    %v796 = vadd.f32 %v792, -0.375
    %v797 = vadd.f32 %v793, -0.375
    %v798 = vpack.c.bf16 %v779, %v778
    %v799 = vpack.c.bf16 %v781, %v780
    %v800 = vpack.c.bf16 %v795, %v794
    %v801 = vpack.c.bf16 %v797, %v796
    %v806 = vunpack.c.l.b16 %v770
    %v807 = vunpack.c.l.b16 %v771
    %v808 = vunpack.c.l.b16 %v772
    %v809 = vunpack.c.l.b16 %v773
    %v810 = vpack.c.b16 %v807, %v806
    %v811 = vpack.c.b16 %v809, %v808
    %v815 = vsel %vm628, %v800, 0
    %v818 = vsel %vm628, %v801, 0
    %820 = vmatprep.subr.bf16.mxu0 0
    %821 = vmatpush1.bf16.msra.mxu0 %v810
    %822 = vmatprep.subr.bf16.mxu0 0
    %823 = vmatpush1.bf16.msra.mxu0 %v811
    %824 = vmatprep.subr.bf16.mxu0 0
    %825 = vmatpush1.bf16.msra.mxu0 0
    %826 = vmatprep.subr.bf16.mxu0 0
    %827 = vmatpush1.bf16.msra.mxu0 0
    %828 = vmatprep.subr.bf16.mxu0 0
    %829 = vmatpush1.bf16.msra.mxu0 0
    %830 = vmatprep.subr.bf16.mxu0 0
    %831 = vmatpush1.bf16.msra.mxu0 0
    %832 = vmatprep.subr.bf16.mxu0 0
    %833 = vmatpush1.bf16.msra.mxu0 0
    %834 = vmatprep.subr.bf16.mxu0 0
    %835 = vmatpush1.bf16.msra.mxu0 0
    %836 = vmatprep.subr.bf16.mxu0 0
    %837 = vmatpush1.bf16.msra.mxu0 0
    %838 = vmatprep.subr.bf16.mxu0 0
    %839 = vmatpush1.bf16.msra.mxu0 0
    %840 = vmatprep.subr.bf16.mxu0 0
    %841 = vmatpush1.bf16.msra.mxu0 0
    %842 = vmatprep.subr.bf16.mxu0 0
    %843 = vmatpush1.bf16.msra.mxu0 0
    %844 = vmatprep.subr.bf16.mxu0 0
    %845 = vmatpush1.bf16.msra.mxu0 0
    %846 = vmatprep.subr.bf16.mxu0 0
    %847 = vmatpush1.bf16.msra.mxu0 0
    %848 = vmatprep.subr.bf16.mxu0 0
    %849 = vmatpush1.bf16.msra.mxu0 0
    %850 = vmatprep.subr.bf16.mxu0 0
    %851 = vmatpush1.bf16.msra.mxu0 0
    %852 = vmatprep.mubr.bf16.mxu0 0
    %853 = vmatmul.mubr.bf16.gmra.mrb[0].mxu0 %v815
    %v854 = vpop.f32.mrb[0].mxu0
    %v855 = vadd.f32 0.0, %v854
    %v856 = vpop.f32.mrb[0].mxu0
    %v857 = vpop.f32.mrb[0].mxu0
    %v858 = vadd.f32 0.0, %v857
    %v859 = vpop.f32.mrb[0].mxu0
    %860 = vmatprep.mubr.bf16.mxu0 0
    %861 = vmatmul.mubr.bf16.gmra.mrb[0].mxu0 %v818
    %v862 = vpop.f32.mrb[0].mxu0
    %v863 = vadd.f32 0.0, %v862
    %v864 = vpop.f32.mrb[0].mxu0
    %v865 = vpop.f32.mrb[0].mxu0
    %v866 = vadd.f32 0.0, %v865
    %v867 = vpop.f32.mrb[0].mxu0
    %868 = vdwg.mxu0
    %v873 = vunpack.c.l.b16 %v766
    %v874 = vunpack.c.l.b16 %v767
    %v875 = vunpack.c.l.b16 %v768
    %v876 = vunpack.c.l.b16 %v769
    %v877 = vpack.c.b16 %v874, %v873
    %v878 = vpack.c.b16 %v876, %v875
    %v882 = vsel %vm628, %v798, 0
    %v885 = vsel %vm628, %v799, 0
    %887 = vmatprep.subr.bf16.mxu0 0
    %888 = vmatpush1.bf16.msra.mxu0 %v877
    %889 = vmatprep.subr.bf16.mxu0 0
    %890 = vmatpush1.bf16.msra.mxu0 %v878
    %891 = vmatprep.subr.bf16.mxu0 0
    %892 = vmatpush1.bf16.msra.mxu0 0
    %893 = vmatprep.subr.bf16.mxu0 0
    %894 = vmatpush1.bf16.msra.mxu0 0
    %895 = vmatprep.subr.bf16.mxu0 0
    %896 = vmatpush1.bf16.msra.mxu0 0
    %897 = vmatprep.subr.bf16.mxu0 0
    %898 = vmatpush1.bf16.msra.mxu0 0
    %899 = vmatprep.subr.bf16.mxu0 0
    %900 = vmatpush1.bf16.msra.mxu0 0
    %901 = vmatprep.subr.bf16.mxu0 0
    %902 = vmatpush1.bf16.msra.mxu0 0
    %903 = vmatprep.subr.bf16.mxu0 0
    %904 = vmatpush1.bf16.msra.mxu0 0
    %905 = vmatprep.subr.bf16.mxu0 0
    %906 = vmatpush1.bf16.msra.mxu0 0
    %907 = vmatprep.subr.bf16.mxu0 0
    %908 = vmatpush1.bf16.msra.mxu0 0
    %909 = vmatprep.subr.bf16.mxu0 0
    %910 = vmatpush1.bf16.msra.mxu0 0
    %911 = vmatprep.subr.bf16.mxu0 0
    %912 = vmatpush1.bf16.msra.mxu0 0
    %913 = vmatprep.subr.bf16.mxu0 0
    %914 = vmatpush1.bf16.msra.mxu0 0
    %915 = vmatprep.subr.bf16.mxu0 0
    %916 = vmatpush1.bf16.msra.mxu0 0
    %917 = vmatprep.subr.bf16.mxu0 0
    %918 = vmatpush1.bf16.msra.mxu0 0
    %919 = vmatprep.mubr.bf16.mxu0 0
    %920 = vmatmul.mubr.bf16.gmra.mrb[0].mxu0 %v882
    %v921 = vpop.f32.mrb[0].mxu0
    %v922 = vadd.f32 %v855, %v921
    %v923 = vpop.f32.mrb[0].mxu0
    %v924 = vpop.f32.mrb[0].mxu0
    %v925 = vadd.f32 %v858, %v924
    %v926 = vpop.f32.mrb[0].mxu0
    %927 = vmatprep.mubr.bf16.mxu0 0
    %928 = vmatmul.mubr.bf16.gmra.mrb[0].mxu0 %v885
    %v929 = vpop.f32.mrb[0].mxu0
    %v930 = vadd.f32 %v863, %v929
    %v931 = vpop.f32.mrb[0].mxu0
    %v932 = vpop.f32.mrb[0].mxu0
    %v933 = vadd.f32 %v866, %v932
    %v934 = vpop.f32.mrb[0].mxu0
    %935 = vdwg.mxu0
    %vm936 = vcmask 523264
    %v937 = vsel %vm936, %v922, -inf
    %v938 = vsel %vm936, %v925, -inf
    %v939 = vmax.f32 %v937, %v938
    %v940 = vrot.slane %v939, 4
    %v941 = vmax.f32 %v939, %v940
    %v942 = vrot.slane %v941, 2
    %v943 = vmax.f32 %v941, %v942
    %v944 = vrot.slane %v943, 1
    %v945 = vmax.f32 %v943, %v944
    %v946 = vsel %vm936, %v930, -inf
    %v947 = vsel %vm936, %v933, -inf
    %v948 = vmax.f32 %v946, %v947
    %v949 = vrot.slane %v948, 4
    %v950 = vmax.f32 %v948, %v949
    %v951 = vrot.slane %v950, 2
    %v952 = vmax.f32 %v950, %v951
    %v953 = vrot.slane %v952, 1
    %v954 = vmax.f32 %v952, %v953
    %v955 = vld [vmem:[#allocation7] sm:$0x1]
    %v957 = vlaneseq
    %v958 = vshrl.u32 %v957, 7
    %v959 = vsub.s32 0, %v958
    %v960 = vrot.slane %v955, %v959
    %v962 = vadd.f32 %v945, %v960
    %v963 = vadd.f32 %v954, %v960
    %v964 = vpack.c.bf16 %v962, %v962
    %v965 = vpack.c.bf16 %v963, %v963
    %v966 = vld [vmem:[%s7] sm:$0xf]
    %v967 = vld [vmem:[%s7 + $0x4] sm:$0xf]
    %v968 = vld [vmem:[%s7 + $0x8] sm:$0xf]
    %v969 = vld [vmem:[%s7 + $0xc] sm:$0xf]
    %v970 = vld [vmem:[%s7 + $0x10] sm:$0xf]
    %v971 = vld [vmem:[%s7 + $0x14] sm:$0xf]
    %v972 = vld [vmem:[%s7 + $0x18] sm:$0xf]
    %v973 = vld [vmem:[%s7 + $0x1c] sm:$0xf]
    %v974 = vld [vmem:[%s8] sm:$0x1]
    %v976 = vlaneseq
    %v977 = vshrl.u32 %v976, 7
    %v978 = vsub.s32 0, %v977
    %v979 = vrot.slane %v974, %v978
    %v983 = vunpack.c.l.b16 %v964
    %v984 = vunpack.c.l.b16 %v965
    %v985 = vrot.slane %v984, 7
    %vm986 = vcmask 1041409
    %v987 = vsel %vm986, %v985, %v983
    %v988 = vpack.c.b16 %v987, %v987
    %v997 = vunpack.c.l.b16 %v966
    %v998 = vunpack.c.l.b16 %v967
    %v999 = vunpack.c.l.b16 %v968
    %v1000 = vunpack.c.l.b16 %v969
    %v1001 = vunpack.c.l.b16 %v970
    %v1002 = vunpack.c.l.b16 %v971
    %v1003 = vunpack.c.l.b16 %v972
    %v1004 = vunpack.c.l.b16 %v973
    %v1005 = vpack.c.b16 %v998, %v997
    %v1006 = vpack.c.b16 %v1000, %v999
    %v1007 = vpack.c.b16 %v1002, %v1001
    %v1008 = vpack.c.b16 %v1004, %v1003
    %v1014 = vsel %vm936, %v988, 0
    %1016 = vmatprep.subr.bf16.mxu0 0
    %1017 = vmatpush1.bf16.msra.mxu0 %v1005
    %1018 = vmatprep.subr.bf16.mxu0 0
    %1019 = vmatpush1.bf16.msra.mxu0 %v1006
    %1020 = vmatprep.subr.bf16.mxu0 0
    %1021 = vmatpush1.bf16.msra.mxu0 %v1007
    %1022 = vmatprep.subr.bf16.mxu0 0
    %1023 = vmatpush1.bf16.msra.mxu0 %v1008
    %1024 = vmatprep.subr.bf16.mxu0 0
    %1025 = vmatpush1.bf16.msra.mxu0 0
    %1026 = vmatprep.subr.bf16.mxu0 0
    %1027 = vmatpush1.bf16.msra.mxu0 0
    %1028 = vmatprep.subr.bf16.mxu0 0
    %1029 = vmatpush1.bf16.msra.mxu0 0
    %1030 = vmatprep.subr.bf16.mxu0 0
    %1031 = vmatpush1.bf16.msra.mxu0 0
    %1032 = vmatprep.subr.bf16.mxu0 0
    %1033 = vmatpush1.bf16.msra.mxu0 0
    %1034 = vmatprep.subr.bf16.mxu0 0
    %1035 = vmatpush1.bf16.msra.mxu0 0
    %1036 = vmatprep.subr.bf16.mxu0 0
    %1037 = vmatpush1.bf16.msra.mxu0 0
    %1038 = vmatprep.subr.bf16.mxu0 0
    %1039 = vmatpush1.bf16.msra.mxu0 0
    %1040 = vmatprep.subr.bf16.mxu0 0
    %1041 = vmatpush1.bf16.msra.mxu0 0
    %1042 = vmatprep.subr.bf16.mxu0 0
    %1043 = vmatpush1.bf16.msra.mxu0 0
    %1044 = vmatprep.subr.bf16.mxu0 0
    %1045 = vmatpush1.bf16.msra.mxu0 0
    %1046 = vmatprep.subr.bf16.mxu0 0
    %1047 = vmatpush1.bf16.msra.mxu0 0
    %1048 = vmatprep.mubr.bf16.mxu0 0
    %1049 = vmatmul.mubr.bf16.gmra.mrb[0].mxu0 %v1014
    %v1050 = vpop.f32.mrb[0].mxu0
    %v1051 = vadd.f32 %v979, %v1050
    %v1052 = vpop.f32.mrb[0].mxu0
    %v1053 = vpop.f32.mrb[0].mxu0
    %v1054 = vpop.f32.mrb[0].mxu0
    %1055 = vdwg.mxu0
    %v1056 = vmax.f32 %v1051, 0.0
    %v1057 = vpack.c.bf16 %v1056, %v1056
    %v1058 = vld [vmem:[%s9] sm:$0xf]
    %v1059 = vld [vmem:[%s9 + $0x4] sm:$0xf]
    %v1060 = vld [vmem:[%s9 + $0x8] sm:$0xf]
    %v1061 = vld [vmem:[%s9 + $0xc] sm:$0xf]
    %v1062 = vld [vmem:[%s10] sm:$0x1]
    %v1064 = vlaneseq
    %v1065 = vshrl.u32 %v1064, 7
    %v1066 = vsub.s32 0, %v1065
    %v1067 = vrot.slane %v1062, %v1066
    %v1073 = vunpack.c.l.b16 %v1058
    %v1074 = vunpack.c.l.b16 %v1059
    %v1075 = vunpack.c.l.b16 %v1060
    %v1076 = vunpack.c.l.b16 %v1061
    %v1077 = vpack.c.b16 %v1074, %v1073
    %v1078 = vpack.c.b16 %v1076, %v1075
    %v1082 = vsel %vm628, %v1057, 0
    %1084 = vmatprep.subr.bf16.mxu0 0
    %1085 = vmatpush1.bf16.msra.mxu0 %v1077
    %1086 = vmatprep.subr.bf16.mxu0 0
    %1087 = vmatpush1.bf16.msra.mxu0 %v1078
    %1088 = vmatprep.subr.bf16.mxu0 0
    %1089 = vmatpush1.bf16.msra.mxu0 0
    %1090 = vmatprep.subr.bf16.mxu0 0
    %1091 = vmatpush1.bf16.msra.mxu0 0
    %1092 = vmatprep.subr.bf16.mxu0 0
    %1093 = vmatpush1.bf16.msra.mxu0 0
    %1094 = vmatprep.subr.bf16.mxu0 0
    %1095 = vmatpush1.bf16.msra.mxu0 0
    %1096 = vmatprep.subr.bf16.mxu0 0
    %1097 = vmatpush1.bf16.msra.mxu0 0
    %1098 = vmatprep.subr.bf16.mxu0 0
    %1099 = vmatpush1.bf16.msra.mxu0 0
    %1100 = vmatprep.subr.bf16.mxu0 0
    %1101 = vmatpush1.bf16.msra.mxu0 0
    %1102 = vmatprep.subr.bf16.mxu0 0
    %1103 = vmatpush1.bf16.msra.mxu0 0
    %1104 = vmatprep.subr.bf16.mxu0 0
    %1105 = vmatpush1.bf16.msra.mxu0 0
    %1106 = vmatprep.subr.bf16.mxu0 0
    %1107 = vmatpush1.bf16.msra.mxu0 0
    %1108 = vmatprep.subr.bf16.mxu0 0
    %1109 = vmatpush1.bf16.msra.mxu0 0
    %1110 = vmatprep.subr.bf16.mxu0 0
    %1111 = vmatpush1.bf16.msra.mxu0 0
    %1112 = vmatprep.subr.bf16.mxu0 0
    %1113 = vmatpush1.bf16.msra.mxu0 0
    %1114 = vmatprep.subr.bf16.mxu0 0
    %1115 = vmatpush1.bf16.msra.mxu0 0
    %1116 = vmatprep.mubr.bf16.mxu0 0
    %1117 = vmatmul.mubr.bf16.gmra.mrb[0].mxu0 %v1082
    %v1118 = vpop.f32.mrb[0].mxu0
    %v1119 = vadd.f32 %v1067, %v1118
    %v1120 = vpop.f32.mrb[0].mxu0
    %v1121 = vpop.f32.mrb[0].mxu0
    %v1122 = vpop.f32.mrb[0].mxu0
    %1123 = vdwg.mxu0
    %v1124 = vmax.f32 %v1119, 0.0
    %v1125 = vpack.c.bf16 %v1124, %v1124
    %v1126 = vld [vmem:[%s11] sm:$0xf]
    %v1127 = vld [vmem:[%s11 + $0x4] sm:$0xf]
    %v1128 = vld [vmem:[%s12] sm:$0x1]
    %v1130 = vlaneseq
    %v1131 = vshrl.u32 %v1130, 7
    %v1132 = vsub.s32 0, %v1131
    %v1133 = vrot.slane %v1128, %v1132
    %v1137 = vunpack.c.l.b16 %v1126
    %v1138 = vunpack.c.l.b16 %v1127
    %v1139 = vpack.c.b16 %v1138, %v1137
    %vm1141 = vcmask 130048
    %v1143 = vsel %vm1141, %v1125, 0
    %1145 = vmatprep.subr.bf16.mxu0 0
    %1146 = vmatpush1.bf16.msra.mxu0 %v1139
    %1147 = vmatprep.subr.bf16.mxu0 0
    %1148 = vmatpush1.bf16.msra.mxu0 0
    %1149 = vmatprep.subr.bf16.mxu0 0
    %1150 = vmatpush1.bf16.msra.mxu0 0
    %1151 = vmatprep.subr.bf16.mxu0 0
    %1152 = vmatpush1.bf16.msra.mxu0 0
    %1153 = vmatprep.subr.bf16.mxu0 0
    %1154 = vmatpush1.bf16.msra.mxu0 0
    %1155 = vmatprep.subr.bf16.mxu0 0
    %1156 = vmatpush1.bf16.msra.mxu0 0
    %1157 = vmatprep.subr.bf16.mxu0 0
    %1158 = vmatpush1.bf16.msra.mxu0 0
    %1159 = vmatprep.subr.bf16.mxu0 0
    %1160 = vmatpush1.bf16.msra.mxu0 0
    %1161 = vmatprep.subr.bf16.mxu0 0
    %1162 = vmatpush1.bf16.msra.mxu0 0
    %1163 = vmatprep.subr.bf16.mxu0 0
    %1164 = vmatpush1.bf16.msra.mxu0 0
    %1165 = vmatprep.subr.bf16.mxu0 0
    %1166 = vmatpush1.bf16.msra.mxu0 0
    %1167 = vmatprep.subr.bf16.mxu0 0
    %1168 = vmatpush1.bf16.msra.mxu0 0
    %1169 = vmatprep.subr.bf16.mxu0 0
    %1170 = vmatpush1.bf16.msra.mxu0 0
    %1171 = vmatprep.subr.bf16.mxu0 0
    %1172 = vmatpush1.bf16.msra.mxu0 0
    %1173 = vmatprep.subr.bf16.mxu0 0
    %1174 = vmatpush1.bf16.msra.mxu0 0
    %1175 = vmatprep.subr.bf16.mxu0 0
    %1176 = vmatpush1.bf16.msra.mxu0 0
    %1177 = vmatprep.mubr.bf16.mxu0 0
    %1178 = vmatmul.mubr.bf16.gmra.mrb[0].mxu0 %v1143
    %v1179 = vpop.f32.mrb[0].mxu0
    %v1180 = vadd.f32 %v1133, %v1179
    %v1181 = vpop.f32.mrb[0].mxu0
    %v1182 = vpop.f32.mrb[0].mxu0
    %v1183 = vpop.f32.mrb[0].mxu0
    %1184 = vdwg.mxu0
    %1185 = vst [vmem:[#allocation8] sm:$0x3] %v1180
    // Predicated region
    $region66: #{tpu_custom_call.1} parent=1 // pred_check
      _
    $region67: #{tpu_custom_call.1} parent=1 // pred_check_branch
      %1187 = sbr.rel (0) target = $region69
    $region68: #{tpu_custom_call.1} parent=1 // pred_region
      %s1189 = ssub.s32 32, 32
      %1190 = vsyncadd [#allocation4], %s1189
      %s1192 = sshll.u32 [#allocation8], 4
      %s1193 = int_to_ptr.vmem [resolvable:$true] %s1192
      %1195 = dma.vmem_to_hbm [thread:$0]  %s1193, 32, %s13, [#allocation4]
    $region69: #{tpu_custom_call.1} parent=1 // pred_fallthru
      _
    // Predicated region
    $region70: #{tpu_custom_call.1} parent=1 // pred_check
      _
    $region71: #{tpu_custom_call.1} parent=1 // pred_check_branch
      %1197 = sbr.rel (0) target = $region73
    $region72: #{tpu_custom_call.1} parent=1 // pred_region
      %1198 = dma.done [#allocation4], 32
    $region73: #{tpu_custom_call.1} parent=1 // pred_fallthru
      _
    %1199 = vsyncpa [#allocation3], 1
    %1200 = vsyncpa [#allocation6], 1
    %1201 = vsyncpa [#allocation4], 1

</llo_original>
